<compile_context>
chip_gen: v5e
topology: v5e:2x2
jax: 0.10.0
libtpu: 0.0.40
codegen_flags: <defaults>
</compile_context>

<pallas_src>
import functools
import math

import jax
import jax.numpy as jnp
from jax import lax
from jax.experimental import pallas as pl
from jax.experimental.pallas import tpu as pltpu

TEMPERATURE = 0.5
BASE_TEMPERATURE = 0.07


def _round_up(x, m):
    return ((x + m - 1) // m) * m


def _default_anchor_tile():
    """MXU-width (lane) anchor tile: 128 on <=v5, 256 on v6e/v7x and newer."""
    try:
        kind = jax.devices()[0].device_kind.lower()
    except Exception:
        return 128
    for tok in ("v2", "v3", "v4", "v5"):
        if tok in kind:
            return 128
    return 256


def _supcon_kernel(a_feat_t_ref, c_feat_ref, a_code_ref, c_code_ref, pc_ref,
                   out_ref, m_scr, l_scr, ps_scr, *,
                   n_valid, tile_a, tile_c, scale_out, exp_dtype):
    """One (anchor-tile, contrast-tile) step of the online-softmax SupCon loss.

    a_feat_t_ref : (D, Ta) anchor features, pre-scaled by 1/temperature and
                   pre-transposed in the wrapper (block index (0, a))
    c_feat_ref   : (Tc, D) contrast features (block index (c, 0))
    a_code_ref   : (1, Ta) int32 label codes for anchors   (padding = -1)
    c_code_ref   : (Tc, 1) int32 label codes for contrasts (padding = -1)
    pc_ref       : (1, Ta) f32 precomputed per-anchor positive counts
    out_ref      : (1, Ta) per-anchor loss, written on the last contrast tile
    m/l/ps       : (1, Ta) f32 running max / softmax denom / sum(pos * score)
    """
    a_idx = pl.program_id(0)
    c_idx = pl.program_id(1)

    @pl.when(c_idx == 0)
    def _init():
        m_scr[...] = jnp.full(m_scr.shape, -1e30, jnp.float32)
        l_scr[...] = jnp.zeros(l_scr.shape, jnp.float32)
        ps_scr[...] = jnp.zeros(ps_scr.shape, jnp.float32)

    # scores[contrast, anchor] on the MXU with f32 accumulation.  The RHS is
    # already (D, Ta) and pre-scaled, so this is a plain K-major matmul with
    # no per-step elementwise scale or transpose.
    s = lax.dot_general(c_feat_ref[...], a_feat_t_ref[...],
                        dimension_numbers=(((1,), (0,)), ((), ())),
                        preferred_element_type=jnp.float32)

    a_code = a_code_ref[...]              # (1, Ta)
    c_code = c_code_ref[...]              # (Tc, 1)

    def _accumulate(s_tile, pos_mask):
        # Online softmax over the contrast axis (sublanes) per anchor (lanes).
        # Only the denominator needs max-rescaling: sum(pos * s) is
        # shift-independent because log_prob = s - logsumexp(s).
        m_prev = m_scr[...]
        m_new = jnp.maximum(m_prev, jnp.max(s_tile, axis=0, keepdims=True))
        alpha = jnp.exp(m_prev - m_new)
        # exp_dtype=bf16 halves EUP/VPU work on v6e/v7x; keep f32 on v5e.
        p = jnp.exp((s_tile - m_new).astype(exp_dtype))
        l_scr[...] = l_scr[...] * alpha + jnp.sum(
            p, axis=0, keepdims=True, dtype=jnp.float32)
        m_scr[...] = m_new
        ps_scr[...] = ps_scr[...] + jnp.sum(
            jnp.where(pos_mask, s_tile, 0.0), axis=0, keepdims=True)

    # Scalar gates: self-contrast masking only matters on tiles intersecting
    # the global diagonal; padding masking only on the padded tail tile.
    a_lo = a_idx * tile_a
    c_lo = c_idx * tile_c
    touches_diag = jnp.logical_and(a_lo < c_lo + tile_c, c_lo < a_lo + tile_a)
    has_pad = (c_lo + tile_c) > n_valid
    slow = jnp.logical_or(touches_diag, has_pad)

    @pl.when(slow)
    def _masked_step():
        # Global row/col indices built from small (Tc,1)/(1,Ta) iotas; the
        # broadcasted compares are the only full-tile mask passes and they run
        # on O(1/g) of the grid steps.
        row = lax.broadcasted_iota(jnp.int32, (s.shape[0], 1), 0) + c_lo
        col = lax.broadcasted_iota(jnp.int32, (1, s.shape[1]), 1) + a_lo
        # keep: not a self pair and not a padded contrast row.  Note: every
        # contrast tile contains >=2 valid rows by construction (padding < Tc
        # and N >= 2), so the -1e30 sentinel can never dominate a whole tile
        # and poison the online max on step 0.
        keep = jnp.logical_and(row != col, row < n_valid)
        s_m = jnp.where(keep, s, -1e30)         # drop from softmax denominator
        pos = jnp.logical_and(c_code == a_code, keep)
        _accumulate(s_m, pos)

    @pl.when(jnp.logical_not(slow))
    def _fast_step():
        # No self pairs and no padding possible in this tile: single compare.
        _accumulate(s, c_code == a_code)

    @pl.when(c_idx == pl.num_programs(1) - 1)
    def _finalize():
        lse = m_scr[...] + jnp.log(l_scr[...])
        # Exact division (runs once per anchor tile on a (1,Ta) row); pc is
        # padded with 1.0 so padded lanes stay finite (they are discarded).
        mean_log_prob_pos = ps_scr[...] / pc_ref[...] - lse
        out_ref[...] = (scale_out * mean_log_prob_pos).astype(out_ref.dtype)


def supcon_loss(features, labels,
                temperature=TEMPERATURE,
                base_temperature=BASE_TEMPERATURE,
                contrast_mode="all",
                anchor_tile=None,          # lane tile; None -> per-chip default
                contrast_tile=None,        # sublane tile; None -> anchor tile
                compute_dtype=jnp.bfloat16,  # use jnp.float32 for strict parity
                exp_dtype=jnp.float32):      # jnp.bfloat16 is safe on v6e/v7x
    """JAX/Pallas equivalent of SupConLoss.forward(features, labels).

    features: [2*bsz, D]  (the two views stacked along the batch dim)
    labels  : [bsz, num_classes] soft scores; top-2 indices define positives.
    """
    if contrast_mode != "all":
        raise ValueError("only contrast_mode='all' is implemented")

    bsz, num_classes = labels.shape
    n, d = features.shape
    assert n == 2 * bsz, "features must be [2*bsz, D] (two views stacked)"

    # PyTorch mask semantics: mask = eq(top1) AND eq(top2)  ==  equal codes,
    # with code = top1 * num_classes + top2.  Anchors/contrasts r map to r % bsz.
    _, top_idx = lax.top_k(labels, 2)
    codes = (top_idx[:, 0] * num_classes + top_idx[:, 1]).astype(jnp.int32)
    codes = jnp.concatenate([codes, codes], axis=0)                  # [N]

    # Per-anchor positive count depends only on the label codes -> compute it
    # once here (O(N log N)) instead of a per-step (T,T) reduction in-kernel.
    sorted_codes = jnp.sort(codes)
    cnt = (jnp.searchsorted(sorted_codes, codes, side="right")
           - jnp.searchsorted(sorted_codes, codes, side="left"))
    pos_cnt = (cnt - 1).astype(jnp.float32)        # >= 1 (the other view)

    # --- tile selection ------------------------------------------------------
    n128 = _round_up(n, 128)
    ta = anchor_tile if anchor_tile is not None else _default_anchor_tile()
    if ta % 128 != 0:
        raise ValueError("anchor_tile must be a multiple of 128")
    ta = min(ta, n128)
    # Keep >= 2 anchor tiles when possible: "parallel" shards grid axis 0, so
    # this is what lets v7x's two TensorCores both get work for small batches
    # (and it also halves vreg pressure of the (Tc,Ta) f32 score tile).
    if ta > 128 and _round_up(n128, ta) // ta < 2:
        ta = 128
    tc = contrast_tile if contrast_tile is not None else ta
    if tc % 128 != 0:
        raise ValueError("contrast_tile must be a multiple of 128")
    tc = min(tc, n128)

    n_pad = _round_up(n, math.lcm(ta, tc))
    g_a, g_c = n_pad // ta, n_pad // tc

    # --- operands -------------------------------------------------------------
    inv_temp = 1.0 / temperature
    feats_c = jnp.pad(features.astype(compute_dtype), ((0, n_pad - n), (0, 0)))
    # Anchor operand: scaled by 1/temperature and transposed to (D, N) once in
    # the wrapper (cheaper than g redundant per-step passes in the kernel) so
    # the kernel RHS is K-major for the MXU.
    feats_a_t = jnp.pad((features * inv_temp).astype(compute_dtype),
                        ((0, n_pad - n), (0, 0))).T

    codes_a = jnp.pad(codes, (0, n_pad - n), constant_values=-1).reshape(1, n_pad)
    codes_c = jnp.pad(codes, (0, n_pad - n), constant_values=-1).reshape(n_pad, 1)
    pos_cnt = jnp.pad(pos_cnt, (0, n_pad - n),
                      constant_values=1.0).reshape(1, n_pad)

    kernel = functools.partial(
        _supcon_kernel,
        n_valid=n, tile_a=ta, tile_c=tc,
        scale_out=-(temperature / base_temperature),
        exp_dtype=exp_dtype)

    itemsize = jnp.dtype(compute_dtype).itemsize
    cost = pl.CostEstimate(
        flops=2 * n_pad * n_pad * d,
        transcendentals=n_pad * n_pad,
        bytes_accessed=(g_a + 1) * n_pad * d * itemsize + 4 * n_pad * 4,
    )

    per_anchor = pl.pallas_call(
        kernel,
        out_shape=jax.ShapeDtypeStruct((1, n_pad), jnp.float32),
        grid_spec=pltpu.PrefetchScalarGridSpec(
            num_scalar_prefetch=0,
            grid=(g_a, g_c),                               # (anchor, contrast) tiles
            in_specs=[
                pl.BlockSpec((d, ta), lambda a, c: (0, a)),   # anchor feats^T (scaled)
                pl.BlockSpec((tc, d), lambda a, c: (c, 0)),   # contrast features
                pl.BlockSpec((1, ta), lambda a, c: (0, a)),   # anchor codes (lane-dense)
                pl.BlockSpec((tc, 1), lambda a, c: (c, 0)),   # contrast codes
                pl.BlockSpec((1, ta), lambda a, c: (0, a)),   # positive counts
            ],
            out_specs=pl.BlockSpec((1, ta), lambda a, c: (0, a)),
            scratch_shapes=[pltpu.VMEM((1, ta), jnp.float32)] * 3,
        ),
        compiler_params=pltpu.CompilerParams(
            # Anchor tiles shard across TensorCores; contrast axis is the
            # online-softmax reduction.  Default VMEM limit is plenty (the
            # pipeline working set is < 1 MiB).
            dimension_semantics=("parallel", "arbitrary"),
        ),
        cost_estimate=cost,
    )(feats_a_t, feats_c, codes_a, codes_c, pos_cnt)

    # loss.view(anchor_count, batch_size).mean() == mean over all real anchors.
    return jnp.mean(per_anchor[0, :n])


def _supcon_loss_ref(features, labels,
                     temperature=TEMPERATURE, base_temperature=BASE_TEMPERATURE,
                     compute_dtype=jnp.float32):
    """Pure-JAX reference mirroring the PyTorch module (optionally bf16 matmul)."""
    bsz = labels.shape[0]
    _, top_idx = lax.top_k(labels, 2)
    p1, p2 = top_idx[:, 0], top_idx[:, 1]
    mask = jnp.logical_and(p1[:, None] == p1[None, :],
                           p2[:, None] == p2[None, :]).astype(jnp.float32)

    n = 2 * bsz
    f = features.astype(compute_dtype)
    sim = jnp.dot(f * (1.0 / temperature), f.T, preferred_element_type=jnp.float32)
    logits = sim - jnp.max(sim, axis=1, keepdims=True)
    logits_mask = 1.0 - jnp.eye(n, dtype=jnp.float32)
    mask_full = jnp.tile(mask, (2, 2)) * logits_mask
    exp_logits = jnp.exp(logits) * logits_mask
    log_prob = logits - jnp.log(jnp.sum(exp_logits, axis=1, keepdims=True))
    mlpp = jnp.sum(mask_full * log_prob, axis=1) / jnp.sum(mask_full, axis=1)
    return jnp.mean(-(temperature / base_temperature) * mlpp)


if __name__ == "__main__":
    key = jax.random.PRNGKey(0)
    k_feat, k_lab, k_feat2, k_lab2 = jax.random.split(key, 4)

    # Main case: N = 2*bsz = 256 -> >=2 anchor tiles (multi-tile online softmax,
    # fast off-diagonal path and slow diagonal path both exercised).
    bsz, feat_dim, num_classes = 128, 64, 10
    features = jax.random.normal(k_feat, (2 * bsz, feat_dim), dtype=jnp.float32)
    features = features / jnp.linalg.norm(features, axis=-1, keepdims=True)
    labels = jax.random.uniform(k_lab, (bsz, num_classes), dtype=jnp.float32)

    loss = jax.block_until_ready(supcon_loss(features, labels))
    ref_bf16 = jax.block_until_ready(
        _supcon_loss_ref(features, labels, compute_dtype=jnp.bfloat16))
    ref_f32 = jax.block_until_ready(
        _supcon_loss_ref(features, labels, compute_dtype=jnp.float32))
    assert jnp.isfinite(loss), "loss is not finite"
    assert jnp.allclose(loss, ref_bf16, rtol=2e-2, atol=2e-2), (loss, ref_bf16)
    assert jnp.allclose(loss, ref_f32, rtol=5e-2, atol=5e-2), (loss, ref_f32)

    # Decoupled-tile case: wide contrast (sublane) tile, narrow anchor tile.
    loss_wide = jax.block_until_ready(
        supcon_loss(features, labels, anchor_tile=128, contrast_tile=256))
    assert jnp.allclose(loss_wide, ref_f32, rtol=5e-2, atol=5e-2), (loss_wide, ref_f32)

    # Tiny case: N = 16 padded up to one 128-wide tile (exercises padding path).
    bsz2, feat_dim2 = 8, 32
    features2 = jax.random.normal(k_feat2, (2 * bsz2, feat_dim2), dtype=jnp.float32)
    features2 = features2 / jnp.linalg.norm(features2, axis=-1, keepdims=True)
    labels2 = jax.random.uniform(k_lab2, (bsz2, num_classes), dtype=jnp.float32)

    loss2 = jax.block_until_ready(supcon_loss(features2, labels2))
    ref2 = jax.block_until_ready(
        _supcon_loss_ref(features2, labels2, compute_dtype=jnp.float32))
    assert jnp.isfinite(loss2), "tiny-case loss is not finite"
    assert jnp.allclose(loss2, ref2, rtol=5e-2, atol=5e-2), (loss2, ref2)

    print("KERNEL_OK")
</pallas_src>

<mosaic_0001>
module attributes {stable_mosaic.version = 11 : i64} {
  func.func @_supcon_kernel(%arg0: i32, %arg1: i32, %arg2: memref<64x128xbf16, #tpu.memory_space<vmem>>, %arg3: memref<128x64xbf16, #tpu.memory_space<vmem>>, %arg4: memref<1x128xi32, #tpu.memory_space<vmem>>, %arg5: memref<128x1xi32, #tpu.memory_space<vmem>>, %arg6: memref<1x128xf32, #tpu.memory_space<vmem>>, %arg7: memref<1x128xf32, #tpu.memory_space<vmem>>, %arg8: memref<1x128xf32, #tpu.memory_space<vmem>>, %arg9: memref<1x128xf32, #tpu.memory_space<vmem>>, %arg10: memref<1x128xf32, #tpu.memory_space<vmem>>) attributes {dimension_semantics = [#tpu.dimension_semantics<parallel>, #tpu.dimension_semantics<arbitrary>], iteration_bounds = array<i64: 2, 2>, scalar_prefetch = 0 : i64, scratch_operands = 3 : i64, tpu.core_type = #tpu.core_type<tc>, window_params = [{transform_indices = @transform_0, window_bounds = array<i64: 64, 128>}, {transform_indices = @transform_1, window_bounds = array<i64: 128, 64>}, {transform_indices = @transform_2, window_bounds = array<i64: 1, 128>}, {transform_indices = @transform_3, window_bounds = array<i64: 128, 1>}, {transform_indices = @transform_4, window_bounds = array<i64: 1, 128>}, {transform_indices = @transform_5, window_bounds = array<i64: 1, 128>}]} {
    %c0_i32 = arith.constant 0 : i32
    %0 = arith.cmpi eq, %arg1, %c0_i32 : i32
    %1 = arith.extui %0 : i1 to i32
    %c0_i32_0 = arith.constant 0 : i32
    %2 = arith.cmpi ne, %1, %c0_i32_0 : i32
    scf.if %2 {
      %cst_15 = arith.constant -1.000000e+30 : f32
      %26 = vector.broadcast %cst_15 : f32 to vector<1x128xf32>
      %c0_16 = arith.constant 0 : index
      %c0_17 = arith.constant 0 : index
      %27 = vector.load %arg8[%c0_16, %c0_17] : memref<1x128xf32, #tpu.memory_space<vmem>>, vector<1x128xf32>
      tpu.vector_store %arg8[%c0_16, %c0_17], %26 {strides = array<i32>} : memref<1x128xf32, #tpu.memory_space<vmem>>, vector<1x128xf32>,
      %cst_18 = arith.constant 0.000000e+00 : f32
      %28 = vector.broadcast %cst_18 : f32 to vector<1x128xf32>
      %c0_19 = arith.constant 0 : index
      %c0_20 = arith.constant 0 : index
      %29 = vector.load %arg9[%c0_19, %c0_20] : memref<1x128xf32, #tpu.memory_space<vmem>>, vector<1x128xf32>
      tpu.vector_store %arg9[%c0_19, %c0_20], %28 {strides = array<i32>} : memref<1x128xf32, #tpu.memory_space<vmem>>, vector<1x128xf32>,
      %cst_21 = arith.constant 0.000000e+00 : f32
      %30 = vector.broadcast %cst_21 : f32 to vector<1x128xf32>
      %c0_22 = arith.constant 0 : index
      %c0_23 = arith.constant 0 : index
      %31 = vector.load %arg10[%c0_22, %c0_23] : memref<1x128xf32, #tpu.memory_space<vmem>>, vector<1x128xf32>
      tpu.vector_store %arg10[%c0_22, %c0_23], %30 {strides = array<i32>} : memref<1x128xf32, #tpu.memory_space<vmem>>, vector<1x128xf32>,
    } else {
    }
    %c0 = arith.constant 0 : index
    %c0_1 = arith.constant 0 : index
    %3 = vector.load %arg3[%c0, %c0_1] : memref<128x64xbf16, #tpu.memory_space<vmem>>, vector<128x64xbf16>
    %c0_2 = arith.constant 0 : index
    %c0_3 = arith.constant 0 : index
    %4 = vector.load %arg2[%c0_2, %c0_3] : memref<64x128xbf16, #tpu.memory_space<vmem>>, vector<64x128xbf16>
    %cst = arith.constant dense<0.000000e+00> : vector<128x128xf32>
    %5 = tpu.matmul %3, %4, %cst {dimension_numbers = #tpu.dot_dimension_numbers<[1], [0], [0], [1], [0, 0, 1, 1], [], []>} : vector<128x64xbf16>, vector<64x128xbf16>, vector<128x128xf32> -> vector<128x128xf32>
    %c0_4 = arith.constant 0 : index
    %c0_5 = arith.constant 0 : index
    %6 = vector.load %arg4[%c0_4, %c0_5] : memref<1x128xi32, #tpu.memory_space<vmem>>, vector<1x128xi32>
    %c0_6 = arith.constant 0 : index
    %c0_7 = arith.constant 0 : index
    %7 = vector.load %arg5[%c0_6, %c0_7] : memref<128x1xi32, #tpu.memory_space<vmem>>, vector<128x1xi32>
    %c128_i32 = arith.constant 128 : i32
    %8 = arith.muli %arg0, %c128_i32 : i32
    %c128_i32_8 = arith.constant 128 : i32
    %9 = arith.muli %arg1, %c128_i32_8 : i32
    %c128_i32_9 = arith.constant 128 : i32
    %10 = arith.addi %9, %c128_i32_9 : i32
    %11 = arith.cmpi slt, %8, %10 : i32
    %c128_i32_10 = arith.constant 128 : i32
    %12 = arith.addi %8, %c128_i32_10 : i32
    %13 = arith.cmpi slt, %9, %12 : i32
    %14 = arith.andi %11, %13 : i1
    %c128_i32_11 = arith.constant 128 : i32
    %15 = arith.addi %9, %c128_i32_11 : i32
    %c256_i32 = arith.constant 256 : i32
    %16 = arith.cmpi sgt, %15, %c256_i32 : i32
    %17 = arith.ori %14, %16 : i1
    %18 = arith.extui %17 : i1 to i32
    %c0_i32_12 = arith.constant 0 : i32
    %19 = arith.cmpi ne, %18, %c0_i32_12 : i32
    scf.if %19 {
      %26 = tpu.iota {dimensions = array<i32: 0>} : vector<128x1xi32>
      %27 = vector.broadcast %9 : i32 to vector<128x1xi32>
      %28 = arith.addi %26, %27 : vector<128x1xi32>
      %29 = tpu.iota {dimensions = array<i32: 1>} : vector<1x128xi32>
      %30 = vector.broadcast %8 : i32 to vector<1x128xi32>
      %31 = arith.addi %29, %30 : vector<1x128xi32>
      %32 = vector.broadcast %28 : vector<128x1xi32> to vector<128x128xi32>
      %33 = vector.broadcast %31 : vector<1x128xi32> to vector<128x128xi32>
      %34 = arith.cmpi ne, %32, %33 : vector<128x128xi32>
      %c256_i32_15 = arith.constant 256 : i32
      %35 = vector.broadcast %c256_i32_15 : i32 to vector<128x1xi32>
      %36 = arith.cmpi slt, %28, %35 : vector<128x1xi32>
      %37 = vector.broadcast %36 : vector<128x1xi1> to vector<128x128xi1>
      %38 = arith.andi %34, %37 : vector<128x128xi1>
      %cst_16 = arith.constant -1.000000e+30 : f32
      %39 = vector.broadcast %cst_16 : f32 to vector<128x128xf32>
      %40 = arith.select %38, %5, %39 : vector<128x128xi1>, vector<128x128xf32>
      %41 = vector.broadcast %7 : vector<128x1xi32> to vector<128x128xi32>
      %42 = vector.broadcast %6 : vector<1x128xi32> to vector<128x128xi32>
      %43 = arith.cmpi eq, %41, %42 : vector<128x128xi32>
      %44 = arith.andi %43, %38 : vector<128x128xi1>
      %c0_17 = arith.constant 0 : index
      %c0_18 = arith.constant 0 : index
      %45 = vector.load %arg8[%c0_17, %c0_18] : memref<1x128xf32, #tpu.memory_space<vmem>>, vector<1x128xf32>
      %cst_19 = arith.constant dense<0xFF800000> : vector<128xf32>
      %46 = vector.multi_reduction <maximumf>, %40, %cst_19 [0] : vector<128x128xf32> to vector<128xf32>
      %47 = vector.shape_cast %46 : vector<128xf32> to vector<1x128xf32>
      %48 = arith.maximumf %45, %47 : vector<1x128xf32>
      %49 = arith.subf %45, %48 : vector<1x128xf32>
      %50 = math.exp %49 : vector<1x128xf32>
      %51 = vector.broadcast %48 : vector<1x128xf32> to vector<128x128xf32>
      %52 = arith.subf %40, %51 : vector<128x128xf32>
      %53 = math.exp %52 : vector<128x128xf32>
      %c0_20 = arith.constant 0 : index
      %c0_21 = arith.constant 0 : index
      %54 = vector.load %arg9[%c0_20, %c0_21] : memref<1x128xf32, #tpu.memory_space<vmem>>, vector<1x128xf32>
      %55 = arith.mulf %54, %50 : vector<1x128xf32>
      %cst_22 = arith.constant dense<0.000000e+00> : vector<128xf32>
      %56 = vector.multi_reduction <add>, %53, %cst_22 [0] : vector<128x128xf32> to vector<128xf32>
      %57 = vector.shape_cast %56 : vector<128xf32> to vector<1x128xf32>
      %58 = arith.addf %55, %57 : vector<1x128xf32>
      %c0_23 = arith.constant 0 : index
      %c0_24 = arith.constant 0 : index
      %59 = vector.load %arg9[%c0_23, %c0_24] : memref<1x128xf32, #tpu.memory_space<vmem>>, vector<1x128xf32>
      tpu.vector_store %arg9[%c0_23, %c0_24], %58 {strides = array<i32>} : memref<1x128xf32, #tpu.memory_space<vmem>>, vector<1x128xf32>,
      %c0_25 = arith.constant 0 : index
      %c0_26 = arith.constant 0 : index
      %60 = vector.load %arg8[%c0_25, %c0_26] : memref<1x128xf32, #tpu.memory_space<vmem>>, vector<1x128xf32>
      tpu.vector_store %arg8[%c0_25, %c0_26], %48 {strides = array<i32>} : memref<1x128xf32, #tpu.memory_space<vmem>>, vector<1x128xf32>,
      %c0_27 = arith.constant 0 : index
      %c0_28 = arith.constant 0 : index
      %61 = vector.load %arg10[%c0_27, %c0_28] : memref<1x128xf32, #tpu.memory_space<vmem>>, vector<1x128xf32>
      %cst_29 = arith.constant 0.000000e+00 : f32
      %62 = vector.broadcast %cst_29 : f32 to vector<128x128xf32>
      %63 = arith.select %44, %40, %62 : vector<128x128xi1>, vector<128x128xf32>
      %cst_30 = arith.constant dense<0.000000e+00> : vector<128xf32>
      %64 = vector.multi_reduction <add>, %63, %cst_30 [0] : vector<128x128xf32> to vector<128xf32>
      %65 = vector.shape_cast %64 : vector<128xf32> to vector<1x128xf32>
      %66 = arith.addf %61, %65 : vector<1x128xf32>
      %c0_31 = arith.constant 0 : index
      %c0_32 = arith.constant 0 : index
      %67 = vector.load %arg10[%c0_31, %c0_32] : memref<1x128xf32, #tpu.memory_space<vmem>>, vector<1x128xf32>
      tpu.vector_store %arg10[%c0_31, %c0_32], %66 {strides = array<i32>} : memref<1x128xf32, #tpu.memory_space<vmem>>, vector<1x128xf32>,
    } else {
    }
    %true = arith.constant true
    %20 = arith.xori %17, %true : i1
    %21 = arith.extui %20 : i1 to i32
    %c0_i32_13 = arith.constant 0 : i32
    %22 = arith.cmpi ne, %21, %c0_i32_13 : i32
    scf.if %22 {
      %26 = vector.broadcast %7 : vector<128x1xi32> to vector<128x128xi32>
      %27 = vector.broadcast %6 : vector<1x128xi32> to vector<128x128xi32>
      %28 = arith.cmpi eq, %26, %27 : vector<128x128xi32>
      %c0_15 = arith.constant 0 : index
      %c0_16 = arith.constant 0 : index
      %29 = vector.load %arg8[%c0_15, %c0_16] : memref<1x128xf32, #tpu.memory_space<vmem>>, vector<1x128xf32>
      %cst_17 = arith.constant dense<0xFF800000> : vector<128xf32>
      %30 = vector.multi_reduction <maximumf>, %5, %cst_17 [0] : vector<128x128xf32> to vector<128xf32>
      %31 = vector.shape_cast %30 : vector<128xf32> to vector<1x128xf32>
      %32 = arith.maximumf %29, %31 : vector<1x128xf32>
      %33 = arith.subf %29, %32 : vector<1x128xf32>
      %34 = math.exp %33 : vector<1x128xf32>
      %35 = vector.broadcast %32 : vector<1x128xf32> to vector<128x128xf32>
      %36 = arith.subf %5, %35 : vector<128x128xf32>
      %37 = math.exp %36 : vector<128x128xf32>
      %c0_18 = arith.constant 0 : index
      %c0_19 = arith.constant 0 : index
      %38 = vector.load %arg9[%c0_18, %c0_19] : memref<1x128xf32, #tpu.memory_space<vmem>>, vector<1x128xf32>
      %39 = arith.mulf %38, %34 : vector<1x128xf32>
      %cst_20 = arith.constant dense<0.000000e+00> : vector<128xf32>
      %40 = vector.multi_reduction <add>, %37, %cst_20 [0] : vector<128x128xf32> to vector<128xf32>
      %41 = vector.shape_cast %40 : vector<128xf32> to vector<1x128xf32>
      %42 = arith.addf %39, %41 : vector<1x128xf32>
      %c0_21 = arith.constant 0 : index
      %c0_22 = arith.constant 0 : index
      %43 = vector.load %arg9[%c0_21, %c0_22] : memref<1x128xf32, #tpu.memory_space<vmem>>, vector<1x128xf32>
      tpu.vector_store %arg9[%c0_21, %c0_22], %42 {strides = array<i32>} : memref<1x128xf32, #tpu.memory_space<vmem>>, vector<1x128xf32>,
      %c0_23 = arith.constant 0 : index
      %c0_24 = arith.constant 0 : index
      %44 = vector.load %arg8[%c0_23, %c0_24] : memref<1x128xf32, #tpu.memory_space<vmem>>, vector<1x128xf32>
      tpu.vector_store %arg8[%c0_23, %c0_24], %32 {strides = array<i32>} : memref<1x128xf32, #tpu.memory_space<vmem>>, vector<1x128xf32>,
      %c0_25 = arith.constant 0 : index
      %c0_26 = arith.constant 0 : index
      %45 = vector.load %arg10[%c0_25, %c0_26] : memref<1x128xf32, #tpu.memory_space<vmem>>, vector<1x128xf32>
      %cst_27 = arith.constant 0.000000e+00 : f32
      %46 = vector.broadcast %cst_27 : f32 to vector<128x128xf32>
      %47 = arith.select %28, %5, %46 : vector<128x128xi1>, vector<128x128xf32>
      %cst_28 = arith.constant dense<0.000000e+00> : vector<128xf32>
      %48 = vector.multi_reduction <add>, %47, %cst_28 [0] : vector<128x128xf32> to vector<128xf32>
      %49 = vector.shape_cast %48 : vector<128xf32> to vector<1x128xf32>
      %50 = arith.addf %45, %49 : vector<1x128xf32>
      %c0_29 = arith.constant 0 : index
      %c0_30 = arith.constant 0 : index
      %51 = vector.load %arg10[%c0_29, %c0_30] : memref<1x128xf32, #tpu.memory_space<vmem>>, vector<1x128xf32>
      tpu.vector_store %arg10[%c0_29, %c0_30], %50 {strides = array<i32>} : memref<1x128xf32, #tpu.memory_space<vmem>>, vector<1x128xf32>,
    } else {
    }
    %c1_i32 = arith.constant 1 : i32
    %23 = arith.cmpi eq, %arg1, %c1_i32 : i32
    %24 = arith.extui %23 : i1 to i32
    %c0_i32_14 = arith.constant 0 : i32
    %25 = arith.cmpi ne, %24, %c0_i32_14 : i32
    scf.if %25 {
      %c0_15 = arith.constant 0 : index
      %c0_16 = arith.constant 0 : index
      %26 = vector.load %arg8[%c0_15, %c0_16] : memref<1x128xf32, #tpu.memory_space<vmem>>, vector<1x128xf32>
      %c0_17 = arith.constant 0 : index
      %c0_18 = arith.constant 0 : index
      %27 = vector.load %arg9[%c0_17, %c0_18] : memref<1x128xf32, #tpu.memory_space<vmem>>, vector<1x128xf32>
      %28 = math.log %27 : vector<1x128xf32>
      %29 = arith.addf %26, %28 : vector<1x128xf32>
      %c0_19 = arith.constant 0 : index
      %c0_20 = arith.constant 0 : index
      %30 = vector.load %arg10[%c0_19, %c0_20] : memref<1x128xf32, #tpu.memory_space<vmem>>, vector<1x128xf32>
      %c0_21 = arith.constant 0 : index
      %c0_22 = arith.constant 0 : index
      %31 = vector.load %arg6[%c0_21, %c0_22] : memref<1x128xf32, #tpu.memory_space<vmem>>, vector<1x128xf32>
      %32 = arith.divf %30, %31 : vector<1x128xf32>
      %33 = arith.subf %32, %29 : vector<1x128xf32>
      %cst_23 = arith.constant -7.14285707 : f32
      %34 = vector.broadcast %cst_23 : f32 to vector<1x128xf32>
      %35 = arith.mulf %34, %33 : vector<1x128xf32>
      %c0_24 = arith.constant 0 : index
      %c0_25 = arith.constant 0 : index
      %36 = vector.load %arg7[%c0_24, %c0_25] : memref<1x128xf32, #tpu.memory_space<vmem>>, vector<1x128xf32>
      tpu.vector_store %arg7[%c0_24, %c0_25], %35 {strides = array<i32>} : memref<1x128xf32, #tpu.memory_space<vmem>>, vector<1x128xf32>,
    } else {
    }
    return
  }
  func.func @transform_0(%arg0: i32, %arg1: i32) -> (i32, i32) {
    %c0_i32 = arith.constant 0 : i32
    %c0_i32_0 = arith.constant 0 : i32
    return %c0_i32, %arg0 : i32, i32
  }
  func.func @transform_1(%arg0: i32, %arg1: i32) -> (i32, i32) {
    %c0_i32 = arith.constant 0 : i32
    %c0_i32_0 = arith.constant 0 : i32
    return %arg1, %c0_i32 : i32, i32
  }
  func.func @transform_2(%arg0: i32, %arg1: i32) -> (i32, i32) {
    %c0_i32 = arith.constant 0 : i32
    %c0_i32_0 = arith.constant 0 : i32
    return %c0_i32, %arg0 : i32, i32
  }
  func.func @transform_3(%arg0: i32, %arg1: i32) -> (i32, i32) {
    %c0_i32 = arith.constant 0 : i32
    %c0_i32_0 = arith.constant 0 : i32
    return %arg1, %c0_i32 : i32, i32
  }
  func.func @transform_4(%arg0: i32, %arg1: i32) -> (i32, i32) {
    %c0_i32 = arith.constant 0 : i32
    %c0_i32_0 = arith.constant 0 : i32
    return %c0_i32, %arg0 : i32, i32
  }
  func.func @transform_5(%arg0: i32, %arg1: i32) -> (i32, i32) {
    %c0_i32 = arith.constant 0 : i32
    %c0_i32_0 = arith.constant 0 : i32
    return %c0_i32, %arg0 : i32, i32
  }
}

</mosaic_0001>

<llo_original>
// kernel: tpu_custom_call.1
$region0: #{tpu_custom_call.1}
  #allocation0 [shape = 'u32[]', space=smem, size = 0x4, offset = 0x4, fixed_abs, tag = 'smem constant byte address 0x4 - core index']
  #allocation1 [shape = 'u32[72,128]{1,0:T(1,128)}', space=vmem, size = 0x9000, scoped, tag = 'internal scratch']
  #allocation2 [shape = 'f32[1,128]{1,0:T(1,128)}', space=vmem, size = 0x200, scoped, tag = 'scratch operand']
  #allocation3 [shape = 'f32[1,128]{1,0:T(1,128)}', space=vmem, size = 0x200, scoped, tag = 'scratch operand']
  #allocation4 [shape = 'f32[1,128]{1,0:T(1,128)}', space=vmem, size = 0x200, scoped, tag = 'scratch operand']
  %s0 = inlined_call_operand.vmem [shape: bf16[64,256], index: 0, kind: input, shape index: {}]
  %s1 = inlined_call_operand.vmem [shape: bf16[256,64], index: 1, kind: input, shape index: {}]
  %s2 = inlined_call_operand.vmem [shape: s32[1,256], index: 2, kind: input, shape index: {}]
  %s3 = inlined_call_operand.vmem [shape: s32[256,1], index: 3, kind: input, shape index: {}]
  %s4 = inlined_call_operand.vmem [shape: f32[1,256], index: 4, kind: input, shape index: {}]
  %s5 = inlined_call_operand.hbm [shape: f32[1,256], index: 5, kind: output, shape index: {}]
  %s6 = sld [smem:[#allocation0]]
  $region110: #{tpu_custom_call.1} parent=0
    _
  %s8 = ssub.s32 1, %s6
  %s9 = scalar_select 0, %s8, %s6
  $region1: #{tpu_custom_call.1} parent=0
    #allocation5 [shape = 'u8[32768]{0}', space=vmem, size = 0x8000, scoped, tag = 'input window, operand 0']
    #allocation6 [shape = 'u8[1024]{0}', space=vmem, size = 0x400, scoped, tag = 'output window, operand 0']
    #allocation7 [shape = 's32[2]{0}', space=sflag, size = 0x8, scoped, tag = 'scoped memory for tpu_custom_call.1']
    %10 = vsyncpa [#allocation7], 0
    %s11 = scalar_lea.sflag [#allocation7], 1
    %12 = vsyncpa %s11, 0
    loop: start=0, step=1, limit=6
    $region2: #{tpu_custom_call.1} parent=1 // loop_pre_header
      _
    $region3: #{tpu_custom_call.1} parent=1 // loop_header
      %s14 = sphi 0, %s18
      %p15 = scmp.ge.s32.totalorder %s14, 6
      %s21 = sphi 0, %s33
      %s22 = sphi 0, %s29
      %s23 = sphi 0, %s21
      %s24 = sphi 0, %s22
      %s25 = sphi 0, %s23
      %s26 = sphi 0, %s24
      %s36 = sphi 0, %s38
      %s39 = sphi 0, %s36
      %s40 = sphi 0, %s39
      %s56 = sphi 0, %s40
      %s62 = sphi 0, %s64
      %s65 = sphi 0, %s62
      %s66 = sphi 0, %s65
      %s82 = sphi 0, %s66
      %s88 = sphi 0, %s90
      %s91 = sphi 0, %s88
      %s92 = sphi 0, %s91
      %s108 = sphi 0, %s92
      %s114 = sphi 0, %s116
      %s117 = sphi 0, %s114
      %s118 = sphi 0, %s117
      %s134 = sphi 0, %s118
      %s140 = sphi 0, %s142
      %s143 = sphi 0, %s140
      %s144 = sphi 0, %s143
      %s160 = sphi 0, %s144
      %s166 = sphi 0, %s168
      %s169 = sphi 0, %s166
      %s170 = sphi 0, %s169
      %s186 = sphi 0, %s170
    $region4: #{tpu_custom_call.1} parent=1 // loop_header_branch
      %17 = sbr.rel (%p15) target = $region8
    $region5: #{tpu_custom_call.1} parent=1 // loop_body
      %s19 = ssub.s32 %s14, 1
      %s20 = ssub.s32 %s14, 2
      %s27 = sadd.s32 1, %s22
      %p28 = scmp.ge.s32.totalorder %s27, 2
      %s29 = scalar_select %p28, 0, %s27
      %s30 = sadd.s32 1, %s21
      %s31 = scalar_select %p28, %s30, %s21
      %p32 = scmp.ge.s32.totalorder %s31, 2
      %s33 = scalar_select %p32, 0, %s31
      %s34 = ssub.s32 %s21, %s33
      %p35 = scmp.eq.s32.totalorder %s34, 0
      %s37 = sadd.s32 %s36, 1
      %s38 = scalar_select %p35, %s36, %s37
      %p41 = pneg %p35
      %p42 = scmp.eq.s32.totalorder %s14, 3
      %p43 = por %p41, %p42
      %p44 = scmp.ne.s32.totalorder %s36, %s39
      %p45 = scmp.eq.s32.totalorder %s14, 0
      %p46 = por %p44, %p45
      %p47 = scmp.ne.s32.totalorder %s36, %s39
      %p48 = scmp.eq.s32.totalorder %s19, 3
      %p49 = por %p47, %p48
      %p50 = scmp.ne.s32.totalorder %s39, %s40
      %p51 = scmp.eq.s32.totalorder %s19, 0
      %p52 = por %p50, %p51
      %p53 = scmp.ne.s32.totalorder %s39, %s40
      %p54 = scmp.eq.s32.totalorder %s20, 3
      %p55 = por %p53, %p54
      %p57 = scmp.ne.s32.totalorder %s40, %s56
      %p58 = scmp.eq.s32.totalorder %s20, 0
      %p59 = por %p57, %p58
      %s60 = ssub.s32 %s22, %s29
      %p61 = scmp.eq.s32.totalorder %s60, 0
      %s63 = sadd.s32 %s62, 1
      %s64 = scalar_select %p61, %s62, %s63
      %p67 = pneg %p61
      %p68 = scmp.eq.s32.totalorder %s14, 3
      %p69 = por %p67, %p68
      %p70 = scmp.ne.s32.totalorder %s62, %s65
      %p71 = scmp.eq.s32.totalorder %s14, 0
      %p72 = por %p70, %p71
      %p73 = scmp.ne.s32.totalorder %s62, %s65
      %p74 = scmp.eq.s32.totalorder %s19, 3
      %p75 = por %p73, %p74
      %p76 = scmp.ne.s32.totalorder %s65, %s66
      %p77 = scmp.eq.s32.totalorder %s19, 0
      %p78 = por %p76, %p77
      %p79 = scmp.ne.s32.totalorder %s65, %s66
      %p80 = scmp.eq.s32.totalorder %s20, 3
      %p81 = por %p79, %p80
      %p83 = scmp.ne.s32.totalorder %s66, %s82
      %p84 = scmp.eq.s32.totalorder %s20, 0
      %p85 = por %p83, %p84
      %s86 = ssub.s32 %s21, %s33
      %p87 = scmp.eq.s32.totalorder %s86, 0
      %s89 = sadd.s32 %s88, 1
      %s90 = scalar_select %p87, %s88, %s89
      %p93 = pneg %p87
      %p94 = scmp.eq.s32.totalorder %s14, 3
      %p95 = por %p93, %p94
      %p96 = scmp.ne.s32.totalorder %s88, %s91
      %p97 = scmp.eq.s32.totalorder %s14, 0
      %p98 = por %p96, %p97
      %p99 = scmp.ne.s32.totalorder %s88, %s91
      %p100 = scmp.eq.s32.totalorder %s19, 3
      %p101 = por %p99, %p100
      %p102 = scmp.ne.s32.totalorder %s91, %s92
      %p103 = scmp.eq.s32.totalorder %s19, 0
      %p104 = por %p102, %p103
      %p105 = scmp.ne.s32.totalorder %s91, %s92
      %p106 = scmp.eq.s32.totalorder %s20, 3
      %p107 = por %p105, %p106
      %p109 = scmp.ne.s32.totalorder %s92, %s108
      %p110 = scmp.eq.s32.totalorder %s20, 0
      %p111 = por %p109, %p110
      %s112 = ssub.s32 %s22, %s29
      %p113 = scmp.eq.s32.totalorder %s112, 0
      %s115 = sadd.s32 %s114, 1
      %s116 = scalar_select %p113, %s114, %s115
      %p119 = pneg %p113
      %p120 = scmp.eq.s32.totalorder %s14, 3
      %p121 = por %p119, %p120
      %p122 = scmp.ne.s32.totalorder %s114, %s117
      %p123 = scmp.eq.s32.totalorder %s14, 0
      %p124 = por %p122, %p123
      %p125 = scmp.ne.s32.totalorder %s114, %s117
      %p126 = scmp.eq.s32.totalorder %s19, 3
      %p127 = por %p125, %p126
      %p128 = scmp.ne.s32.totalorder %s117, %s118
      %p129 = scmp.eq.s32.totalorder %s19, 0
      %p130 = por %p128, %p129
      %p131 = scmp.ne.s32.totalorder %s117, %s118
      %p132 = scmp.eq.s32.totalorder %s20, 3
      %p133 = por %p131, %p132
      %p135 = scmp.ne.s32.totalorder %s118, %s134
      %p136 = scmp.eq.s32.totalorder %s20, 0
      %p137 = por %p135, %p136
      %s138 = ssub.s32 %s21, %s33
      %p139 = scmp.eq.s32.totalorder %s138, 0
      %s141 = sadd.s32 %s140, 1
      %s142 = scalar_select %p139, %s140, %s141
      %p145 = pneg %p139
      %p146 = scmp.eq.s32.totalorder %s14, 3
      %p147 = por %p145, %p146
      %p148 = scmp.ne.s32.totalorder %s140, %s143
      %p149 = scmp.eq.s32.totalorder %s14, 0
      %p150 = por %p148, %p149
      %p151 = scmp.ne.s32.totalorder %s140, %s143
      %p152 = scmp.eq.s32.totalorder %s19, 3
      %p153 = por %p151, %p152
      %p154 = scmp.ne.s32.totalorder %s143, %s144
      %p155 = scmp.eq.s32.totalorder %s19, 0
      %p156 = por %p154, %p155
      %p157 = scmp.ne.s32.totalorder %s143, %s144
      %p158 = scmp.eq.s32.totalorder %s20, 3
      %p159 = por %p157, %p158
      %p161 = scmp.ne.s32.totalorder %s144, %s160
      %p162 = scmp.eq.s32.totalorder %s20, 0
      %p163 = por %p161, %p162
      %s164 = ssub.s32 %s21, %s33
      %p165 = scmp.eq.s32.totalorder %s164, 0
      %s167 = sadd.s32 %s166, 1
      %s168 = scalar_select %p165, %s166, %s167
      %p171 = pneg %p165
      %p172 = scmp.eq.s32.totalorder %s14, 3
      %p173 = por %p171, %p172
      %p174 = scmp.ne.s32.totalorder %s166, %s169
      %p175 = scmp.eq.s32.totalorder %s14, 0
      %p176 = por %p174, %p175
      %p177 = scmp.ne.s32.totalorder %s166, %s169
      %p178 = scmp.eq.s32.totalorder %s19, 3
      %p179 = por %p177, %p178
      %p180 = scmp.ne.s32.totalorder %s169, %s170
      %p181 = scmp.eq.s32.totalorder %s19, 0
      %p182 = por %p180, %p181
      %p183 = scmp.ne.s32.totalorder %s169, %s170
      %p184 = scmp.eq.s32.totalorder %s20, 3
      %p185 = por %p183, %p184
      %p187 = scmp.ne.s32.totalorder %s170, %s186
      %p188 = scmp.eq.s32.totalorder %s20, 0
      %p189 = por %p187, %p188
      %p190 = scmp.le.s32.totalorder 1, %s14
      %p191 = scmp.lt.s32.totalorder %s14, 5
      %p192 = pnand %p190, %p191
      %p193 = pneg %p192
      // Predicated region
      $region9: #{tpu_custom_call.1} parent=5 // pred_check
        _
      $region10: #{tpu_custom_call.1} parent=5 // pred_check_branch
        %195 = sbr.rel (%p192) target = $region12
      $region11: #{tpu_custom_call.1} parent=5 // pred_region
        %s196 = ssub.s32 %s14, 1
      $region12: #{tpu_custom_call.1} parent=5 // pred_fallthru
        _
      %p197 = scmp.lt.s32.totalorder %s14, 4
      // Predicated region
      $region13: #{tpu_custom_call.1} parent=5 // pred_check
        %p198 = pneg %p197
      $region14: #{tpu_custom_call.1} parent=5 // pred_check_branch
        %200 = sbr.rel (%p198) target = $region16
      $region15: #{tpu_custom_call.1} parent=5 // pred_region
        // Predicated region
        $region17: #{tpu_custom_call.1} parent=15 // pred_check
          %p201 = pneg %p46
        $region18: #{tpu_custom_call.1} parent=15 // pred_check_branch
          %203 = sbr.rel (%p201) target = $region20
        $region19: #{tpu_custom_call.1} parent=15 // pred_region
          %s204 = sand.u32 %s36, 1
          %s205 = sand.u32 %s36, 1
          %s206 = smul.addr %s205, 32
          %s207 = scalar_lea.vmem [#allocation5], %s206
          %s208 = smul.addr %s21, 4
          %s209 = scalar_lea.vmem %s0, %s208
          // Predicated region
          $region21: #{tpu_custom_call.1} parent=19 // pred_check
            _
          $region22: #{tpu_custom_call.1} parent=19 // pred_check_branch
            %211 = sbr.rel (0) target = $region24
          $region23: #{tpu_custom_call.1} parent=19 // pred_region
            // Predicated region
            $region25: #{tpu_custom_call.1} parent=23 // pred_check
              _
            $region26: #{tpu_custom_call.1} parent=23 // pred_check_branch
              %213 = sbr.rel target = $region28
            $region27: #{tpu_custom_call.1} parent=23 // pred_region
              // Predicated region
              $region40: #{tpu_custom_call.1} parent=27 // pred_check
                _
              $region41: #{tpu_custom_call.1} parent=27 // pred_check_branch
                %243 = sbr.rel (0) target = $region43
              $region42: #{tpu_custom_call.1} parent=27 // pred_region
                loop: start=0, step=1, limit=1
                $region44: #{tpu_custom_call.1} parent=42 // loop_pre_header
                  _
                $region45: #{tpu_custom_call.1} parent=42 // loop_header
                  %s245 = sphi 0, %s249
                  %p246 = scmp.ge.s32.totalorder %s245, 1
                  %s250 = sphi %s209, %s209
                  %s251 = sphi %s207, %s207
                $region46: #{tpu_custom_call.1} parent=42 // loop_header_branch
                  %248 = sbr.rel (%p246) target = $region50
                $region47: #{tpu_custom_call.1} parent=42 // loop_body
                  _
                $region48: #{tpu_custom_call.1} parent=42 // loop_footer
                  %s249 = sadd.s32 1, %s245
                $region49: #{tpu_custom_call.1} parent=42 // loop_footer_branch
                  %244 = sbr.rel target = $region45
                $region50: #{tpu_custom_call.1} parent=42 // loop_exit
                  _
                %s253 = ssub.s32 16, 1
                loop: start=0, step=1, limit=1
                $region51: #{tpu_custom_call.1} parent=42 // loop_pre_header
                  _
                $region52: #{tpu_custom_call.1} parent=42 // loop_header
                  %s255 = sphi 0, %s259
                  %p256 = scmp.ge.s32.totalorder %s255, 1
                  %s260 = sphi %s209, %s209
                  %s261 = sphi %s207, %s207
                $region53: #{tpu_custom_call.1} parent=42 // loop_header_branch
                  %258 = sbr.rel (%p256) target = $region57
                $region54: #{tpu_custom_call.1} parent=42 // loop_body
                  %v262 = vld [vmem:[%s260] sm:%s253]
                  %263 = vst [vmem:[%s261] sm:%s253] %v262
                  %v264 = vld [vmem:[%s260 + $0x8] sm:%s253]
                  %265 = vst [vmem:[%s261 + $0x4] sm:%s253] %v264
                  %v266 = vld [vmem:[%s260 + $0x10] sm:%s253]
                  %267 = vst [vmem:[%s261 + $0x8] sm:%s253] %v266
                  %v268 = vld [vmem:[%s260 + $0x18] sm:%s253]
                  %269 = vst [vmem:[%s261 + $0xc] sm:%s253] %v268
                  %v270 = vld [vmem:[%s260 + $0x20] sm:%s253]
                  %271 = vst [vmem:[%s261 + $0x10] sm:%s253] %v270
                  %v272 = vld [vmem:[%s260 + $0x28] sm:%s253]
                  %273 = vst [vmem:[%s261 + $0x14] sm:%s253] %v272
                  %v274 = vld [vmem:[%s260 + $0x30] sm:%s253]
                  %275 = vst [vmem:[%s261 + $0x18] sm:%s253] %v274
                  %v276 = vld [vmem:[%s260 + $0x38] sm:%s253]
                  %277 = vst [vmem:[%s261 + $0x1c] sm:%s253] %v276
                $region55: #{tpu_custom_call.1} parent=42 // loop_footer
                  %s259 = sadd.s32 1, %s255
                $region56: #{tpu_custom_call.1} parent=42 // loop_footer_branch
                  %254 = sbr.rel target = $region52
                $region57: #{tpu_custom_call.1} parent=42 // loop_exit
                  _
              $region43: #{tpu_custom_call.1} parent=27 // pred_fallthru
                _
            $region28: #{tpu_custom_call.1} parent=23 // pred_fallthru
              _
            // Predicated region
            $region29: #{tpu_custom_call.1} parent=23 // pred_check
              _
            $region30: #{tpu_custom_call.1} parent=23 // pred_check_branch
              %215 = sbr.rel (0) target = $region32
            $region31: #{tpu_custom_call.1} parent=23 // pred_region
              %s217 = ssub.s32 16, 1
              loop: start=0, step=1, limit=1
              $region33: #{tpu_custom_call.1} parent=31 // loop_pre_header
                _
              $region34: #{tpu_custom_call.1} parent=31 // loop_header
                %s219 = sphi 0, %s223
                %p220 = scmp.ge.s32.totalorder %s219, 1
                %s224 = sphi %s209, %s209
                %s225 = sphi %s207, %s207
              $region35: #{tpu_custom_call.1} parent=31 // loop_header_branch
                %222 = sbr.rel (%p220) target = $region39
              $region36: #{tpu_custom_call.1} parent=31 // loop_body
                %v226 = vld [vmem:[%s224] sm:%s217]
                %227 = vst [vmem:[%s225] sm:%s217] %v226
                %v228 = vld [vmem:[%s224 + $0x8] sm:%s217]
                %229 = vst [vmem:[%s225 + $0x4] sm:%s217] %v228
                %v230 = vld [vmem:[%s224 + $0x10] sm:%s217]
                %231 = vst [vmem:[%s225 + $0x8] sm:%s217] %v230
                %v232 = vld [vmem:[%s224 + $0x18] sm:%s217]
                %233 = vst [vmem:[%s225 + $0xc] sm:%s217] %v232
                %v234 = vld [vmem:[%s224 + $0x20] sm:%s217]
                %235 = vst [vmem:[%s225 + $0x10] sm:%s217] %v234
                %v236 = vld [vmem:[%s224 + $0x28] sm:%s217]
                %237 = vst [vmem:[%s225 + $0x14] sm:%s217] %v236
                %v238 = vld [vmem:[%s224 + $0x30] sm:%s217]
                %239 = vst [vmem:[%s225 + $0x18] sm:%s217] %v238
                %v240 = vld [vmem:[%s224 + $0x38] sm:%s217]
                %241 = vst [vmem:[%s225 + $0x1c] sm:%s217] %v240
              $region37: #{tpu_custom_call.1} parent=31 // loop_footer
                %s223 = sadd.s32 1, %s219
              $region38: #{tpu_custom_call.1} parent=31 // loop_footer_branch
                %218 = sbr.rel target = $region34
              $region39: #{tpu_custom_call.1} parent=31 // loop_exit
                _
            $region32: #{tpu_custom_call.1} parent=23 // pred_fallthru
              _
          $region24: #{tpu_custom_call.1} parent=19 // pred_fallthru
            _
          %278 = vnop
        $region20: #{tpu_custom_call.1} parent=15 // pred_fallthru
          _
        // Predicated region
        $region58: #{tpu_custom_call.1} parent=15 // pred_check
          %p279 = pneg %p72
        $region59: #{tpu_custom_call.1} parent=15 // pred_check_branch
          %281 = sbr.rel (%p279) target = $region61
        $region60: #{tpu_custom_call.1} parent=15 // pred_region
          %s282 = smul.u32 16, %s22
          %p283 = scmp.lt.s32.totalorder %s282, 31
          %s284 = scalar_select %p283, %s282, 31
          %s285 = smul.addr %s284, 4
          %s286 = scalar_lea.vmem %s1, %s285
          %s287 = smul.u32 16, %s22
        $region61: #{tpu_custom_call.1} parent=15 // pred_fallthru
          _
        // Predicated region
        $region62: #{tpu_custom_call.1} parent=15 // pred_check
          %p288 = pneg %p98
        $region63: #{tpu_custom_call.1} parent=15 // pred_check_branch
          %290 = sbr.rel (%p288) target = $region65
        $region64: #{tpu_custom_call.1} parent=15 // pred_region
          %p291 = scmp.lt.s32.totalorder %s21, 1
          %s292 = scalar_select %p291, %s21, 1
          %s293 = scalar_lea.vmem %s2, %s292
        $region65: #{tpu_custom_call.1} parent=15 // pred_fallthru
          _
        // Predicated region
        $region66: #{tpu_custom_call.1} parent=15 // pred_check
          %p294 = pneg %p124
        $region67: #{tpu_custom_call.1} parent=15 // pred_check_branch
          %296 = sbr.rel (%p294) target = $region69
        $region68: #{tpu_custom_call.1} parent=15 // pred_region
          %s297 = smul.u32 16, %s22
          %p298 = scmp.lt.s32.totalorder %s297, 31
          %s299 = scalar_select %p298, %s297, 31
          %s300 = smul.addr %s299, 8
          %s301 = scalar_lea.vmem %s3, %s300
          %s302 = smul.u32 16, %s22
        $region69: #{tpu_custom_call.1} parent=15 // pred_fallthru
          _
        // Predicated region
        $region70: #{tpu_custom_call.1} parent=15 // pred_check
          %p303 = pneg %p150
        $region71: #{tpu_custom_call.1} parent=15 // pred_check_branch
          %305 = sbr.rel (%p303) target = $region73
        $region72: #{tpu_custom_call.1} parent=15 // pred_region
          %p306 = scmp.lt.s32.totalorder %s21, 1
          %s307 = scalar_select %p306, %s21, 1
          %s308 = scalar_lea.vmem %s4, %s307
        $region73: #{tpu_custom_call.1} parent=15 // pred_fallthru
          _
      $region16: #{tpu_custom_call.1} parent=5 // pred_fallthru
        _
      %p309 = scmp.le.s32.totalorder 1, %s14
      %p310 = scmp.lt.s32.totalorder %s14, 5
      %p311 = pnand %p309, %p310
      %p312 = pneg %p311
      // Predicated region
      $region74: #{tpu_custom_call.1} parent=5 // pred_check
        _
      $region75: #{tpu_custom_call.1} parent=5 // pred_check_branch
        %314 = sbr.rel (%p311) target = $region77
      $region76: #{tpu_custom_call.1} parent=5 // pred_region
        %s315 = ssub.s32 %s14, 1
        %s316 = sand.u32 %s39, 1
        %s317 = sand.u32 %s39, 1
        %s318 = smul.addr %s317, 32
        %s319 = scalar_lea.vmem [#allocation5], %s318
        // Predicated region
        $region78: #{tpu_custom_call.1} parent=76 // pred_check
          %p320 = pneg %p52
        $region79: #{tpu_custom_call.1} parent=76 // pred_check_branch
          %322 = sbr.rel (%p320) target = $region81
        $region80: #{tpu_custom_call.1} parent=76 // pred_region
          _
        $region81: #{tpu_custom_call.1} parent=76 // pred_fallthru
          _
        %s323 = sand.u32 %s39, 1
        %s324 = sand.u32 %s39, 1
        %s325 = smul.addr %s324, 32
        %s326 = scalar_lea.vmem [#allocation5], %s325
        %p327 = pneg %p52
        %p328 = pneg %p49
        %s329 = smul.u32 16, %s24
        %p330 = scmp.lt.s32.totalorder %s329, 31
        %s331 = scalar_select %p330, %s329, 31
        %s332 = smul.addr %s331, 4
        %s333 = scalar_lea.vmem %s1, %s332
        %p334 = pneg %p78
        %p335 = pneg %p75
        %p336 = scmp.lt.s32.totalorder %s23, 1
        %s337 = scalar_select %p336, %s23, 1
        %s338 = scalar_lea.vmem %s2, %s337
        %p339 = pneg %p104
        %p340 = pneg %p101
        %s341 = smul.u32 16, %s24
        %p342 = scmp.lt.s32.totalorder %s341, 31
        %s343 = scalar_select %p342, %s341, 31
        %s344 = smul.addr %s343, 8
        %s345 = scalar_lea.vmem %s3, %s344
        %p346 = pneg %p130
        %p347 = pneg %p127
        %p348 = scmp.lt.s32.totalorder %s23, 1
        %s349 = scalar_select %p348, %s23, 1
        %s350 = scalar_lea.vmem %s4, %s349
        %p351 = pneg %p156
        %p352 = pneg %p153
        %p353 = pneg %p182
        %p354 = pneg %p179
        %s355 = sand.u32 %s169, 1
        %s356 = scalar_lea.sflag [#allocation7], %s355
        %s357 = sand.u32 %s169, 1
        %s358 = scalar_lea.vmem [#allocation6], %s357
        %s359 = smul.u32 16, %s24
        %p360 = scmp.lt.s32.totalorder %s359, 31
        %s361 = scalar_select %p360, %s359, 31
        %s362 = smul.addr %s361, 4
        %s363 = scalar_lea.vmem %s1, %s362
        %s364 = smul.u32 16, %s24
        %p365 = scmp.lt.s32.totalorder %s23, 1
        %s366 = scalar_select %p365, %s23, 1
        %s367 = scalar_lea.vmem %s2, %s366
        %s368 = smul.u32 16, %s24
        %p369 = scmp.lt.s32.totalorder %s368, 31
        %s370 = scalar_select %p369, %s368, 31
        %s371 = smul.addr %s370, 8
        %s372 = scalar_lea.vmem %s3, %s371
        %s373 = smul.u32 16, %s24
        %p374 = scmp.lt.s32.totalorder %s23, 1
        %s375 = scalar_select %p374, %s23, 1
        %s376 = scalar_lea.vmem %s4, %s375
        %p378 = scmp.eq.s32.totalorder %s24, 0
        // Predicated region
        $region82: #{tpu_custom_call.1} parent=76 // pred_check
          %p379 = pneg %p378
        $region83: #{tpu_custom_call.1} parent=76 // pred_check_branch
          %381 = sbr.rel (%p379) target = $region85
        $region84: #{tpu_custom_call.1} parent=76 // pred_region
          %382 = vst [vmem:[#allocation2] sm:$0x1] -1e+30
          %383 = vst [vmem:[#allocation3] sm:$0x1] 0.0
          %384 = vst [vmem:[#allocation4] sm:$0x1] 0.0
        $region85: #{tpu_custom_call.1} parent=76 // pred_fallthru
          _
        %v385 = vld [vmem:[%s363] sm:$0xf]
        %v386 = vld [vmem:[%s363 + $0x4] sm:$0xf]
        %v387 = vld [vmem:[%s363 + $0x8] sm:$0xf]
        %v388 = vld [vmem:[%s363 + $0xc] sm:$0xf]
        %v389 = vld [vmem:[%s363 + $0x10] sm:$0xf]
        %v390 = vld [vmem:[%s363 + $0x14] sm:$0xf]
        %v391 = vld [vmem:[%s363 + $0x18] sm:$0xf]
        %v392 = vld [vmem:[%s363 + $0x1c] sm:$0xf]
        %v393 = vld [vmem:[%s363 + $0x20] sm:$0xf]
        %v394 = vld [vmem:[%s363 + $0x24] sm:$0xf]
        %v395 = vld [vmem:[%s363 + $0x28] sm:$0xf]
        %v396 = vld [vmem:[%s363 + $0x2c] sm:$0xf]
        %v397 = vld [vmem:[%s363 + $0x30] sm:$0xf]
        %v398 = vld [vmem:[%s363 + $0x34] sm:$0xf]
        %v399 = vld [vmem:[%s363 + $0x38] sm:$0xf]
        %v400 = vld [vmem:[%s363 + $0x3c] sm:$0xf]
        %v401 = vld [vmem:[%s319] sm:$0xf]
        %v402 = vld [vmem:[%s319 + $0x4] sm:$0xf]
        %v403 = vld [vmem:[%s319 + $0x8] sm:$0xf]
        %v404 = vld [vmem:[%s319 + $0xc] sm:$0xf]
        %v405 = vld [vmem:[%s319 + $0x10] sm:$0xf]
        %v406 = vld [vmem:[%s319 + $0x14] sm:$0xf]
        %v407 = vld [vmem:[%s319 + $0x18] sm:$0xf]
        %v408 = vld [vmem:[%s319 + $0x1c] sm:$0xf]
        %v425 = vunpack.c.l.b16 %v385
        %v426 = vunpack.c.l.b16 %v386
        %v427 = vunpack.c.l.b16 %v387
        %v428 = vunpack.c.l.b16 %v388
        %v429 = vunpack.c.l.b16 %v389
        %v430 = vunpack.c.l.b16 %v390
        %v431 = vunpack.c.l.b16 %v391
        %v432 = vunpack.c.l.b16 %v392
        %v433 = vunpack.c.l.b16 %v393
        %v434 = vunpack.c.l.b16 %v394
        %v435 = vunpack.c.l.b16 %v395
        %v436 = vunpack.c.l.b16 %v396
        %v437 = vunpack.c.l.b16 %v397
        %v438 = vunpack.c.l.b16 %v398
        %v439 = vunpack.c.l.b16 %v399
        %v440 = vunpack.c.l.b16 %v400
        %v441 = vpack.c.b16 %v426, %v425
        %v442 = vpack.c.b16 %v428, %v427
        %v443 = vpack.c.b16 %v430, %v429
        %v444 = vpack.c.b16 %v432, %v431
        %v445 = vpack.c.b16 %v434, %v433
        %v446 = vpack.c.b16 %v436, %v435
        %v447 = vpack.c.b16 %v438, %v437
        %v448 = vpack.c.b16 %v440, %v439
        %v457 = vunpack.c.l.b16 %v401
        %v458 = vunpack.c.l.b16 %v402
        %v459 = vunpack.c.l.b16 %v403
        %v460 = vunpack.c.l.b16 %v404
        %v461 = vunpack.c.l.b16 %v405
        %v462 = vunpack.c.l.b16 %v406
        %v463 = vunpack.c.l.b16 %v407
        %v464 = vunpack.c.l.b16 %v408
        %v465 = vpack.c.b16 %v458, %v457
        %v466 = vpack.c.b16 %v460, %v459
        %v467 = vpack.c.b16 %v462, %v461
        %v468 = vpack.c.b16 %v464, %v463
        %vm473 = vcmask 523264
        %v475 = vsel %vm473, %v441, 0
        %v478 = vsel %vm473, %v442, 0
        %v481 = vsel %vm473, %v443, 0
        %v484 = vsel %vm473, %v444, 0
        %v487 = vsel %vm473, %v445, 0
        %v490 = vsel %vm473, %v446, 0
        %v493 = vsel %vm473, %v447, 0
        %v496 = vsel %vm473, %v448, 0
        %498 = vmatpush.bf16.msra.mxu0 0
        %499 = vmatpush.bf16.msra.mxu0 0
        %500 = vmatpush.bf16.msra.mxu0 0
        %501 = vmatpush.bf16.msra.mxu0 0
        %502 = vmatpush.bf16.msra.mxu0 %v468
        %503 = vmatpush.bf16.msra.mxu0 %v467
        %504 = vmatpush.bf16.msra.mxu0 %v466
        %505 = vmatpush.bf16.msra.mxu0 %v465
        %506 = vmatmul.bf16.gmra.mxu0 %v475
        %v507 = vpop.f32.mrf.mxu0
        %v508 = vadd.f32 0.0, %v507
        %v509 = vpop.f32.mrf.mxu0
        %v510 = vadd.f32 0.0, %v509
        %511 = vmatmul.bf16.gmra.mxu0 %v478
        %v512 = vpop.f32.mrf.mxu0
        %v513 = vadd.f32 0.0, %v512
        %v514 = vpop.f32.mrf.mxu0
        %v515 = vadd.f32 0.0, %v514
        %516 = vmatmul.bf16.gmra.mxu0 %v481
        %v517 = vpop.f32.mrf.mxu0
        %v518 = vadd.f32 0.0, %v517
        %v519 = vpop.f32.mrf.mxu0
        %v520 = vadd.f32 0.0, %v519
        %521 = vmatmul.bf16.gmra.mxu0 %v484
        %v522 = vpop.f32.mrf.mxu0
        %v523 = vadd.f32 0.0, %v522
        %v524 = vpop.f32.mrf.mxu0
        %v525 = vadd.f32 0.0, %v524
        %526 = vmatmul.bf16.gmra.mxu0 %v487
        %v527 = vpop.f32.mrf.mxu0
        %v528 = vadd.f32 0.0, %v527
        %v529 = vpop.f32.mrf.mxu0
        %v530 = vadd.f32 0.0, %v529
        %531 = vmatmul.bf16.gmra.mxu0 %v490
        %v532 = vpop.f32.mrf.mxu0
        %v533 = vadd.f32 0.0, %v532
        %v534 = vpop.f32.mrf.mxu0
        %v535 = vadd.f32 0.0, %v534
        %536 = vmatmul.bf16.gmra.mxu0 %v493
        %v537 = vpop.f32.mrf.mxu0
        %v538 = vadd.f32 0.0, %v537
        %v539 = vpop.f32.mrf.mxu0
        %v540 = vadd.f32 0.0, %v539
        %541 = vmatmul.bf16.gmra.mxu0 %v496
        %v542 = vpop.f32.mrf.mxu0
        %v543 = vadd.f32 0.0, %v542
        %v544 = vpop.f32.mrf.mxu0
        %v545 = vadd.f32 0.0, %v544
        %546 = vdwg.mxu0
        %v547 = vld [vmem:[%s367] sm:$0x1]
        %v548 = vld [vmem:[%s372] sm:$0xff]
        %v549 = vld [vmem:[%s372 + $0x8] sm:$0xff]
        %v550 = vld [vmem:[%s372 + $0x10] sm:$0xff]
        %v551 = vld [vmem:[%s372 + $0x18] sm:$0xff]
        %v552 = vld [vmem:[%s372 + $0x20] sm:$0xff]
        %v553 = vld [vmem:[%s372 + $0x28] sm:$0xff]
        %v554 = vld [vmem:[%s372 + $0x30] sm:$0xff]
        %v555 = vld [vmem:[%s372 + $0x38] sm:$0xff]
        %v556 = vld [vmem:[%s372 + $0x40] sm:$0xff]
        %v557 = vld [vmem:[%s372 + $0x48] sm:$0xff]
        %v558 = vld [vmem:[%s372 + $0x50] sm:$0xff]
        %v559 = vld [vmem:[%s372 + $0x58] sm:$0xff]
        %v560 = vld [vmem:[%s372 + $0x60] sm:$0xff]
        %v561 = vld [vmem:[%s372 + $0x68] sm:$0xff]
        %v562 = vld [vmem:[%s372 + $0x70] sm:$0xff]
        %v563 = vld [vmem:[%s372 + $0x78] sm:$0xff]
        %s564 = smul.u32 %s23, 128
        %s565 = smul.u32 %s24, 128
        %s566 = sadd.s32 %s565, 128
        %p567 = scmp.lt.s32.totalorder %s564, %s566
        %s568 = sadd.s32 %s564, 128
        %p569 = scmp.lt.s32.totalorder %s565, %s568
        %p570 = pnand %p567, %p569
        %p571 = pneg %p570
        %p572 = scmp.gt.s32.totalorder %s566, 256
        %p573 = por %p571, %p572
        // Predicated region
        $region86: #{tpu_custom_call.1} parent=76 // pred_check
          %p574 = pneg %p573
        $region87: #{tpu_custom_call.1} parent=76 // pred_check_branch
          %576 = sbr.rel (%p574) target = $region89
        $region88: #{tpu_custom_call.1} parent=76 // pred_region
          %v577 = vlaneseq
          %v578 = vshrl.u32 %v577, 7
          %v579 = vadd.s32 %v578, 8
          %v580 = vadd.s32 %v578, 16
          %v581 = vadd.s32 %v578, 24
          %v582 = vadd.s32 %v578, 32
          %v583 = vadd.s32 %v578, 40
          %v584 = vadd.s32 %v578, 48
          %v585 = vadd.s32 %v578, 56
          %v586 = vadd.s32 %v578, 64
          %v587 = vadd.s32 %v578, 72
          %v588 = vadd.s32 %v578, 80
          %v589 = vadd.s32 %v578, 88
          %v590 = vadd.s32 %v578, 96
          %v591 = vadd.s32 %v578, 104
          %v592 = vadd.s32 %v578, 112
          %v593 = vadd.s32 %v578, 120
          %v594 = vstv %s565
          %v595 = vadd.s32 %v578, %v594
          %v596 = vadd.s32 %v579, %v594
          %v597 = vadd.s32 %v580, %v594
          %v598 = vadd.s32 %v581, %v594
          %v599 = vadd.s32 %v582, %v594
          %v600 = vadd.s32 %v583, %v594
          %v601 = vadd.s32 %v584, %v594
          %v602 = vadd.s32 %v585, %v594
          %v603 = vadd.s32 %v586, %v594
          %v604 = vadd.s32 %v587, %v594
          %v605 = vadd.s32 %v588, %v594
          %v606 = vadd.s32 %v589, %v594
          %v607 = vadd.s32 %v590, %v594
          %v608 = vadd.s32 %v591, %v594
          %v609 = vadd.s32 %v592, %v594
          %v610 = vadd.s32 %v593, %v594
          %v611 = vlaneseq
          %v612 = vand.u32 %v611, 127
          %v613 = vstv %s564
          %v614 = vadd.s32 %v612, %v613
          %vm615 = vcmp.ne.s32.totalorder %v595, %v614
          %vm616 = vcmp.ne.s32.totalorder %v596, %v614
          %vm617 = vcmp.ne.s32.totalorder %v597, %v614
          %vm618 = vcmp.ne.s32.totalorder %v598, %v614
          %vm619 = vcmp.ne.s32.totalorder %v599, %v614
          %vm620 = vcmp.ne.s32.totalorder %v600, %v614
          %vm621 = vcmp.ne.s32.totalorder %v601, %v614
          %vm622 = vcmp.ne.s32.totalorder %v602, %v614
          %vm623 = vcmp.ne.s32.totalorder %v603, %v614
          %vm624 = vcmp.ne.s32.totalorder %v604, %v614
          %vm625 = vcmp.ne.s32.totalorder %v605, %v614
          %vm626 = vcmp.ne.s32.totalorder %v606, %v614
          %vm627 = vcmp.ne.s32.totalorder %v607, %v614
          %vm628 = vcmp.ne.s32.totalorder %v608, %v614
          %vm629 = vcmp.ne.s32.totalorder %v609, %v614
          %vm630 = vcmp.ne.s32.totalorder %v610, %v614
          %vm631 = vcmp.lt.s32.totalorder %v595, 256
          %vm632 = vcmp.lt.s32.totalorder %v596, 256
          %vm633 = vcmp.lt.s32.totalorder %v597, 256
          %vm634 = vcmp.lt.s32.totalorder %v598, 256
          %vm635 = vcmp.lt.s32.totalorder %v599, 256
          %vm636 = vcmp.lt.s32.totalorder %v600, 256
          %vm637 = vcmp.lt.s32.totalorder %v601, 256
          %vm638 = vcmp.lt.s32.totalorder %v602, 256
          %vm639 = vcmp.lt.s32.totalorder %v603, 256
          %vm640 = vcmp.lt.s32.totalorder %v604, 256
          %vm641 = vcmp.lt.s32.totalorder %v605, 256
          %vm642 = vcmp.lt.s32.totalorder %v606, 256
          %vm643 = vcmp.lt.s32.totalorder %v607, 256
          %vm644 = vcmp.lt.s32.totalorder %v608, 256
          %vm645 = vcmp.lt.s32.totalorder %v609, 256
          %vm646 = vcmp.lt.s32.totalorder %v610, 256
          %v647 = vsel %vm631, 1, 0
          %v648 = vsel %vm632, 1, 0
          %v649 = vsel %vm633, 1, 0
          %v650 = vsel %vm634, 1, 0
          %v651 = vsel %vm635, 1, 0
          %v652 = vsel %vm636, 1, 0
          %v653 = vsel %vm637, 1, 0
          %v654 = vsel %vm638, 1, 0
          %v655 = vsel %vm639, 1, 0
          %v656 = vsel %vm640, 1, 0
          %v657 = vsel %vm641, 1, 0
          %v658 = vsel %vm642, 1, 0
          %v659 = vsel %vm643, 1, 0
          %v660 = vsel %vm644, 1, 0
          %v661 = vsel %vm645, 1, 0
          %v662 = vsel %vm646, 1, 0
          %vm663 = vcmp.eq.s32.totalorder %v647, 1
          %vm664 = vcmp.eq.s32.totalorder %v648, 1
          %vm665 = vcmp.eq.s32.totalorder %v649, 1
          %vm666 = vcmp.eq.s32.totalorder %v650, 1
          %vm667 = vcmp.eq.s32.totalorder %v651, 1
          %vm668 = vcmp.eq.s32.totalorder %v652, 1
          %vm669 = vcmp.eq.s32.totalorder %v653, 1
          %vm670 = vcmp.eq.s32.totalorder %v654, 1
          %vm671 = vcmp.eq.s32.totalorder %v655, 1
          %vm672 = vcmp.eq.s32.totalorder %v656, 1
          %vm673 = vcmp.eq.s32.totalorder %v657, 1
          %vm674 = vcmp.eq.s32.totalorder %v658, 1
          %vm675 = vcmp.eq.s32.totalorder %v659, 1
          %vm676 = vcmp.eq.s32.totalorder %v660, 1
          %vm677 = vcmp.eq.s32.totalorder %v661, 1
          %vm678 = vcmp.eq.s32.totalorder %v662, 1
          %vm679 = vmand %vm615, %vm663
          %vm680 = vmand %vm616, %vm664
          %vm681 = vmand %vm617, %vm665
          %vm682 = vmand %vm618, %vm666
          %vm683 = vmand %vm619, %vm667
          %vm684 = vmand %vm620, %vm668
          %vm685 = vmand %vm621, %vm669
          %vm686 = vmand %vm622, %vm670
          %vm687 = vmand %vm623, %vm671
          %vm688 = vmand %vm624, %vm672
          %vm689 = vmand %vm625, %vm673
          %vm690 = vmand %vm626, %vm674
          %vm691 = vmand %vm627, %vm675
          %vm692 = vmand %vm628, %vm676
          %vm693 = vmand %vm629, %vm677
          %vm694 = vmand %vm630, %vm678
          %v695 = vsel %vm679, %v508, -1e+30
          %v696 = vsel %vm680, %v510, -1e+30
          %v697 = vsel %vm681, %v513, -1e+30
          %v698 = vsel %vm682, %v515, -1e+30
          %v699 = vsel %vm683, %v518, -1e+30
          %v700 = vsel %vm684, %v520, -1e+30
          %v701 = vsel %vm685, %v523, -1e+30
          %v702 = vsel %vm686, %v525, -1e+30
          %v703 = vsel %vm687, %v528, -1e+30
          %v704 = vsel %vm688, %v530, -1e+30
          %v705 = vsel %vm689, %v533, -1e+30
          %v706 = vsel %vm690, %v535, -1e+30
          %v707 = vsel %vm691, %v538, -1e+30
          %v708 = vsel %vm692, %v540, -1e+30
          %v709 = vsel %vm693, %v543, -1e+30
          %v710 = vsel %vm694, %v545, -1e+30
          %711 = vset.pattern.permute.xlu0 0
          %712 = vperm.xlu0 %711, %v548
          %v713 = vpop.permute.xlu0 %712
          %714 = vset.pattern.permute.xlu0 0
          %715 = vperm.xlu0 %714, %v549
          %v716 = vpop.permute.xlu0 %715
          %717 = vset.pattern.permute.xlu0 0
          %718 = vperm.xlu0 %717, %v550
          %v719 = vpop.permute.xlu0 %718
          %720 = vset.pattern.permute.xlu0 0
          %721 = vperm.xlu0 %720, %v551
          %v722 = vpop.permute.xlu0 %721
          %723 = vset.pattern.permute.xlu0 0
          %724 = vperm.xlu0 %723, %v552
          %v725 = vpop.permute.xlu0 %724
          %726 = vset.pattern.permute.xlu0 0
          %727 = vperm.xlu0 %726, %v553
          %v728 = vpop.permute.xlu0 %727
          %729 = vset.pattern.permute.xlu0 0
          %730 = vperm.xlu0 %729, %v554
          %v731 = vpop.permute.xlu0 %730
          %732 = vset.pattern.permute.xlu0 0
          %733 = vperm.xlu0 %732, %v555
          %v734 = vpop.permute.xlu0 %733
          %735 = vset.pattern.permute.xlu0 0
          %736 = vperm.xlu0 %735, %v556
          %v737 = vpop.permute.xlu0 %736
          %738 = vset.pattern.permute.xlu0 0
          %739 = vperm.xlu0 %738, %v557
          %v740 = vpop.permute.xlu0 %739
          %741 = vset.pattern.permute.xlu0 0
          %742 = vperm.xlu0 %741, %v558
          %v743 = vpop.permute.xlu0 %742
          %744 = vset.pattern.permute.xlu0 0
          %745 = vperm.xlu0 %744, %v559
          %v746 = vpop.permute.xlu0 %745
          %747 = vset.pattern.permute.xlu0 0
          %748 = vperm.xlu0 %747, %v560
          %v749 = vpop.permute.xlu0 %748
          %750 = vset.pattern.permute.xlu0 0
          %751 = vperm.xlu0 %750, %v561
          %v752 = vpop.permute.xlu0 %751
          %753 = vset.pattern.permute.xlu0 0
          %754 = vperm.xlu0 %753, %v562
          %v755 = vpop.permute.xlu0 %754
          %756 = vset.pattern.permute.xlu0 0
          %757 = vperm.xlu0 %756, %v563
          %v758 = vpop.permute.xlu0 %757
          %v759 = vperm.slane %v547, 0
          %vm760 = vcmp.eq.s32.totalorder %v713, %v759
          %vm761 = vcmp.eq.s32.totalorder %v716, %v759
          %vm762 = vcmp.eq.s32.totalorder %v719, %v759
          %vm763 = vcmp.eq.s32.totalorder %v722, %v759
          %vm764 = vcmp.eq.s32.totalorder %v725, %v759
          %vm765 = vcmp.eq.s32.totalorder %v728, %v759
          %vm766 = vcmp.eq.s32.totalorder %v731, %v759
          %vm767 = vcmp.eq.s32.totalorder %v734, %v759
          %vm768 = vcmp.eq.s32.totalorder %v737, %v759
          %vm769 = vcmp.eq.s32.totalorder %v740, %v759
          %vm770 = vcmp.eq.s32.totalorder %v743, %v759
          %vm771 = vcmp.eq.s32.totalorder %v746, %v759
          %vm772 = vcmp.eq.s32.totalorder %v749, %v759
          %vm773 = vcmp.eq.s32.totalorder %v752, %v759
          %vm774 = vcmp.eq.s32.totalorder %v755, %v759
          %vm775 = vcmp.eq.s32.totalorder %v758, %v759
          %vm776 = vmand %vm760, %vm679
          %vm777 = vmand %vm761, %vm680
          %vm778 = vmand %vm762, %vm681
          %vm779 = vmand %vm763, %vm682
          %vm780 = vmand %vm764, %vm683
          %vm781 = vmand %vm765, %vm684
          %vm782 = vmand %vm766, %vm685
          %vm783 = vmand %vm767, %vm686
          %vm784 = vmand %vm768, %vm687
          %vm785 = vmand %vm769, %vm688
          %vm786 = vmand %vm770, %vm689
          %vm787 = vmand %vm771, %vm690
          %vm788 = vmand %vm772, %vm691
          %vm789 = vmand %vm773, %vm692
          %vm790 = vmand %vm774, %vm693
          %vm791 = vmand %vm775, %vm694
          %v792 = vld [vmem:[#allocation2] sm:$0x1]
          %v793 = vmax.f32 %v695, %v699
          %v794 = vmax.f32 %v696, %v700
          %v795 = vmax.f32 %v697, %v701
          %v796 = vmax.f32 %v698, %v702
          %v797 = vmax.f32 %v793, %v703
          %v798 = vmax.f32 %v794, %v704
          %v799 = vmax.f32 %v795, %v705
          %v800 = vmax.f32 %v796, %v706
          %v801 = vmax.f32 %v797, %v707
          %v802 = vmax.f32 %v798, %v708
          %v803 = vmax.f32 %v799, %v709
          %v804 = vmax.f32 %v800, %v710
          %v805 = vmax.f32 %v801, %v802
          %v806 = vmax.f32 %v803, %v804
          %v807 = vmax.f32 %v805, %v806
          %v808 = vrot.slane %v807, 4
          %v809 = vmax.f32 %v807, %v808
          %v810 = vrot.slane %v809, 2
          %v811 = vmax.f32 %v809, %v810
          %v812 = vrot.slane %v811, 1
          %v813 = vmax.f32 %v811, %v812
          %v814 = vmax.f32 %v792, %v813
          %v815 = vsub.f32 %v792, %v814
          %v816 = vmul.f32 %v815, 1.442695
          %v817 = vpow.pop %v816
          %v819 = vperm.slane %v814, 0
          %v821 = vsub.f32 %v695, %v819
          %v822 = vsub.f32 %v696, %v819
          %v823 = vsub.f32 %v697, %v819
          %v824 = vsub.f32 %v698, %v819
          %v825 = vsub.f32 %v699, %v819
          %v826 = vsub.f32 %v700, %v819
          %v827 = vsub.f32 %v701, %v819
          %v828 = vsub.f32 %v702, %v819
          %v829 = vsub.f32 %v703, %v819
          %v830 = vsub.f32 %v704, %v819
          %v831 = vsub.f32 %v705, %v819
          %v832 = vsub.f32 %v706, %v819
          %v833 = vsub.f32 %v707, %v819
          %v834 = vsub.f32 %v708, %v819
          %v835 = vsub.f32 %v709, %v819
          %v836 = vsub.f32 %v710, %v819
          %v837 = vmul.f32 %v821, 1.442695
          %v838 = vpow.pop %v837
          %v839 = vmul.f32 %v822, 1.442695
          %v840 = vpow.pop %v839
          %v841 = vmul.f32 %v823, 1.442695
          %v842 = vpow.pop %v841
          %v843 = vmul.f32 %v824, 1.442695
          %v844 = vpow.pop %v843
          %v845 = vmul.f32 %v825, 1.442695
          %v846 = vpow.pop %v845
          %v847 = vmul.f32 %v826, 1.442695
          %v848 = vpow.pop %v847
          %v849 = vmul.f32 %v827, 1.442695
          %v850 = vpow.pop %v849
          %v851 = vmul.f32 %v828, 1.442695
          %v852 = vpow.pop %v851
          %v853 = vmul.f32 %v829, 1.442695
          %v854 = vpow.pop %v853
          %v855 = vmul.f32 %v830, 1.442695
          %v856 = vpow.pop %v855
          %v857 = vmul.f32 %v831, 1.442695
          %v858 = vpow.pop %v857
          %v859 = vmul.f32 %v832, 1.442695
          %v860 = vpow.pop %v859
          %v861 = vmul.f32 %v833, 1.442695
          %v862 = vpow.pop %v861
          %v863 = vmul.f32 %v834, 1.442695
          %v864 = vpow.pop %v863
          %v865 = vmul.f32 %v835, 1.442695
          %v866 = vpow.pop %v865
          %v867 = vmul.f32 %v836, 1.442695
          %v868 = vpow.pop %v867
          %v869 = vld [vmem:[#allocation3] sm:$0x1]
          %v870 = vmul.f32 %v869, %v817
          %v871 = vadd.f32 %v838, %v840
          %v872 = vadd.f32 %v871, %v842
          %v873 = vadd.f32 %v872, %v844
          %v874 = vadd.f32 %v873, %v846
          %v875 = vadd.f32 %v874, %v848
          %v876 = vadd.f32 %v875, %v850
          %v877 = vadd.f32 %v876, %v852
          %v878 = vadd.f32 %v877, %v854
          %v879 = vadd.f32 %v878, %v856
          %v880 = vadd.f32 %v879, %v858
          %v881 = vadd.f32 %v880, %v860
          %v882 = vadd.f32 %v881, %v862
          %v883 = vadd.f32 %v882, %v864
          %v884 = vadd.f32 %v883, %v866
          %v885 = vadd.f32 %v884, %v868
          %v886 = vrot.slane %v885, 4
          %v887 = vadd.f32 %v885, %v886
          %v888 = vrot.slane %v887, 2
          %v889 = vadd.f32 %v887, %v888
          %v890 = vrot.slane %v889, 1
          %v891 = vadd.f32 %v889, %v890
          %v892 = vadd.f32 %v870, %v891
          %893 = vst [vmem:[#allocation3] sm:$0x1] %v892
          %894 = vst [vmem:[#allocation2] sm:$0x1] %v814
          %v895 = vld [vmem:[#allocation4] sm:$0x1]
          %v896 = vsel %vm776, %v695, 0.0
          %v897 = vsel %vm777, %v696, 0.0
          %v898 = vsel %vm778, %v697, 0.0
          %v899 = vsel %vm779, %v698, 0.0
          %v900 = vsel %vm780, %v699, 0.0
          %v901 = vsel %vm781, %v700, 0.0
          %v902 = vsel %vm782, %v701, 0.0
          %v903 = vsel %vm783, %v702, 0.0
          %v904 = vsel %vm784, %v703, 0.0
          %v905 = vsel %vm785, %v704, 0.0
          %v906 = vsel %vm786, %v705, 0.0
          %v907 = vsel %vm787, %v706, 0.0
          %v908 = vsel %vm788, %v707, 0.0
          %v909 = vsel %vm789, %v708, 0.0
          %v910 = vsel %vm790, %v709, 0.0
          %v911 = vsel %vm791, %v710, 0.0
          %v912 = vadd.f32 %v896, %v897
          %v913 = vadd.f32 %v912, %v898
          %v914 = vadd.f32 %v913, %v899
          %v915 = vadd.f32 %v914, %v900
          %v916 = vadd.f32 %v915, %v901
          %v917 = vadd.f32 %v916, %v902
          %v918 = vadd.f32 %v917, %v903
          %v919 = vadd.f32 %v918, %v904
          %v920 = vadd.f32 %v919, %v905
          %v921 = vadd.f32 %v920, %v906
          %v922 = vadd.f32 %v921, %v907
          %v923 = vadd.f32 %v922, %v908
          %v924 = vadd.f32 %v923, %v909
          %v925 = vadd.f32 %v924, %v910
          %v926 = vadd.f32 %v925, %v911
          %v927 = vrot.slane %v926, 4
          %v928 = vadd.f32 %v926, %v927
          %v929 = vrot.slane %v928, 2
          %v930 = vadd.f32 %v928, %v929
          %v931 = vrot.slane %v930, 1
          %v932 = vadd.f32 %v930, %v931
          %v933 = vadd.f32 %v895, %v932
          %934 = vst [vmem:[#allocation4] sm:$0x1] %v933
        $region89: #{tpu_custom_call.1} parent=76 // pred_fallthru
          _
        %p935 = pneg %p573
        // Predicated region
        $region90: #{tpu_custom_call.1} parent=76 // pred_check
          _
        $region91: #{tpu_custom_call.1} parent=76 // pred_check_branch
          %937 = sbr.rel (%p573) target = $region93
        $region92: #{tpu_custom_call.1} parent=76 // pred_region
          %938 = vset.pattern.permute.xlu0 0
          %939 = vperm.xlu0 %938, %v548
          %v940 = vpop.permute.xlu0 %939
          %941 = vset.pattern.permute.xlu0 0
          %942 = vperm.xlu0 %941, %v549
          %v943 = vpop.permute.xlu0 %942
          %944 = vset.pattern.permute.xlu0 0
          %945 = vperm.xlu0 %944, %v550
          %v946 = vpop.permute.xlu0 %945
          %947 = vset.pattern.permute.xlu0 0
          %948 = vperm.xlu0 %947, %v551
          %v949 = vpop.permute.xlu0 %948
          %950 = vset.pattern.permute.xlu0 0
          %951 = vperm.xlu0 %950, %v552
          %v952 = vpop.permute.xlu0 %951
          %953 = vset.pattern.permute.xlu0 0
          %954 = vperm.xlu0 %953, %v553
          %v955 = vpop.permute.xlu0 %954
          %956 = vset.pattern.permute.xlu0 0
          %957 = vperm.xlu0 %956, %v554
          %v958 = vpop.permute.xlu0 %957
          %959 = vset.pattern.permute.xlu0 0
          %960 = vperm.xlu0 %959, %v555
          %v961 = vpop.permute.xlu0 %960
          %962 = vset.pattern.permute.xlu0 0
          %963 = vperm.xlu0 %962, %v556
          %v964 = vpop.permute.xlu0 %963
          %965 = vset.pattern.permute.xlu0 0
          %966 = vperm.xlu0 %965, %v557
          %v967 = vpop.permute.xlu0 %966
          %968 = vset.pattern.permute.xlu0 0
          %969 = vperm.xlu0 %968, %v558
          %v970 = vpop.permute.xlu0 %969
          %971 = vset.pattern.permute.xlu0 0
          %972 = vperm.xlu0 %971, %v559
          %v973 = vpop.permute.xlu0 %972
          %974 = vset.pattern.permute.xlu0 0
          %975 = vperm.xlu0 %974, %v560
          %v976 = vpop.permute.xlu0 %975
          %977 = vset.pattern.permute.xlu0 0
          %978 = vperm.xlu0 %977, %v561
          %v979 = vpop.permute.xlu0 %978
          %980 = vset.pattern.permute.xlu0 0
          %981 = vperm.xlu0 %980, %v562
          %v982 = vpop.permute.xlu0 %981
          %983 = vset.pattern.permute.xlu0 0
          %984 = vperm.xlu0 %983, %v563
          %v985 = vpop.permute.xlu0 %984
          %v986 = vperm.slane %v547, 0
          %vm987 = vcmp.eq.s32.totalorder %v940, %v986
          %vm988 = vcmp.eq.s32.totalorder %v943, %v986
          %vm989 = vcmp.eq.s32.totalorder %v946, %v986
          %vm990 = vcmp.eq.s32.totalorder %v949, %v986
          %vm991 = vcmp.eq.s32.totalorder %v952, %v986
          %vm992 = vcmp.eq.s32.totalorder %v955, %v986
          %vm993 = vcmp.eq.s32.totalorder %v958, %v986
          %vm994 = vcmp.eq.s32.totalorder %v961, %v986
          %vm995 = vcmp.eq.s32.totalorder %v964, %v986
          %vm996 = vcmp.eq.s32.totalorder %v967, %v986
          %vm997 = vcmp.eq.s32.totalorder %v970, %v986
          %vm998 = vcmp.eq.s32.totalorder %v973, %v986
          %vm999 = vcmp.eq.s32.totalorder %v976, %v986
          %vm1000 = vcmp.eq.s32.totalorder %v979, %v986
          %vm1001 = vcmp.eq.s32.totalorder %v982, %v986
          %vm1002 = vcmp.eq.s32.totalorder %v985, %v986
          %v1003 = vld [vmem:[#allocation2] sm:$0x1]
          %v1004 = vmax.f32 %v508, %v518
          %v1005 = vmax.f32 %v510, %v520
          %v1006 = vmax.f32 %v513, %v523
          %v1007 = vmax.f32 %v515, %v525
          %v1008 = vmax.f32 %v1004, %v528
          %v1009 = vmax.f32 %v1005, %v530
          %v1010 = vmax.f32 %v1006, %v533
          %v1011 = vmax.f32 %v1007, %v535
          %v1012 = vmax.f32 %v1008, %v538
          %v1013 = vmax.f32 %v1009, %v540
          %v1014 = vmax.f32 %v1010, %v543
          %v1015 = vmax.f32 %v1011, %v545
          %v1016 = vmax.f32 %v1012, %v1013
          %v1017 = vmax.f32 %v1014, %v1015
          %v1018 = vmax.f32 %v1016, %v1017
          %v1019 = vrot.slane %v1018, 4
          %v1020 = vmax.f32 %v1018, %v1019
          %v1021 = vrot.slane %v1020, 2
          %v1022 = vmax.f32 %v1020, %v1021
          %v1023 = vrot.slane %v1022, 1
          %v1024 = vmax.f32 %v1022, %v1023
          %v1025 = vmax.f32 %v1003, %v1024
          %v1026 = vsub.f32 %v1003, %v1025
          %v1027 = vmul.f32 %v1026, 1.442695
          %v1028 = vpow.pop %v1027
          %v1030 = vperm.slane %v1025, 0
          %v1032 = vsub.f32 %v508, %v1030
          %v1033 = vsub.f32 %v510, %v1030
          %v1034 = vsub.f32 %v513, %v1030
          %v1035 = vsub.f32 %v515, %v1030
          %v1036 = vsub.f32 %v518, %v1030
          %v1037 = vsub.f32 %v520, %v1030
          %v1038 = vsub.f32 %v523, %v1030
          %v1039 = vsub.f32 %v525, %v1030
          %v1040 = vsub.f32 %v528, %v1030
          %v1041 = vsub.f32 %v530, %v1030
          %v1042 = vsub.f32 %v533, %v1030
          %v1043 = vsub.f32 %v535, %v1030
          %v1044 = vsub.f32 %v538, %v1030
          %v1045 = vsub.f32 %v540, %v1030
          %v1046 = vsub.f32 %v543, %v1030
          %v1047 = vsub.f32 %v545, %v1030
          %v1048 = vmul.f32 %v1032, 1.442695
          %v1049 = vpow.pop %v1048
          %v1050 = vmul.f32 %v1033, 1.442695
          %v1051 = vpow.pop %v1050
          %v1052 = vmul.f32 %v1034, 1.442695
          %v1053 = vpow.pop %v1052
          %v1054 = vmul.f32 %v1035, 1.442695
          %v1055 = vpow.pop %v1054
          %v1056 = vmul.f32 %v1036, 1.442695
          %v1057 = vpow.pop %v1056
          %v1058 = vmul.f32 %v1037, 1.442695
          %v1059 = vpow.pop %v1058
          %v1060 = vmul.f32 %v1038, 1.442695
          %v1061 = vpow.pop %v1060
          %v1062 = vmul.f32 %v1039, 1.442695
          %v1063 = vpow.pop %v1062
          %v1064 = vmul.f32 %v1040, 1.442695
          %v1065 = vpow.pop %v1064
          %v1066 = vmul.f32 %v1041, 1.442695
          %v1067 = vpow.pop %v1066
          %v1068 = vmul.f32 %v1042, 1.442695
          %v1069 = vpow.pop %v1068
          %v1070 = vmul.f32 %v1043, 1.442695
          %v1071 = vpow.pop %v1070
          %v1072 = vmul.f32 %v1044, 1.442695
          %v1073 = vpow.pop %v1072
          %v1074 = vmul.f32 %v1045, 1.442695
          %v1075 = vpow.pop %v1074
          %v1076 = vmul.f32 %v1046, 1.442695
          %v1077 = vpow.pop %v1076
          %v1078 = vmul.f32 %v1047, 1.442695
          %v1079 = vpow.pop %v1078
          %v1080 = vld [vmem:[#allocation3] sm:$0x1]
          %v1081 = vmul.f32 %v1080, %v1028
          %v1082 = vadd.f32 %v1049, %v1051
          %v1083 = vadd.f32 %v1082, %v1053
          %v1084 = vadd.f32 %v1083, %v1055
          %v1085 = vadd.f32 %v1084, %v1057
          %v1086 = vadd.f32 %v1085, %v1059
          %v1087 = vadd.f32 %v1086, %v1061
          %v1088 = vadd.f32 %v1087, %v1063
          %v1089 = vadd.f32 %v1088, %v1065
          %v1090 = vadd.f32 %v1089, %v1067
          %v1091 = vadd.f32 %v1090, %v1069
          %v1092 = vadd.f32 %v1091, %v1071
          %v1093 = vadd.f32 %v1092, %v1073
          %v1094 = vadd.f32 %v1093, %v1075
          %v1095 = vadd.f32 %v1094, %v1077
          %v1096 = vadd.f32 %v1095, %v1079
          %v1097 = vrot.slane %v1096, 4
          %v1098 = vadd.f32 %v1096, %v1097
          %v1099 = vrot.slane %v1098, 2
          %v1100 = vadd.f32 %v1098, %v1099
          %v1101 = vrot.slane %v1100, 1
          %v1102 = vadd.f32 %v1100, %v1101
          %v1103 = vadd.f32 %v1081, %v1102
          %1104 = vst [vmem:[#allocation3] sm:$0x1] %v1103
          %1105 = vst [vmem:[#allocation2] sm:$0x1] %v1025
          %v1106 = vld [vmem:[#allocation4] sm:$0x1]
          %v1107 = vsel %vm987, %v508, 0.0
          %v1108 = vsel %vm988, %v510, 0.0
          %v1109 = vsel %vm989, %v513, 0.0
          %v1110 = vsel %vm990, %v515, 0.0
          %v1111 = vsel %vm991, %v518, 0.0
          %v1112 = vsel %vm992, %v520, 0.0
          %v1113 = vsel %vm993, %v523, 0.0
          %v1114 = vsel %vm994, %v525, 0.0
          %v1115 = vsel %vm995, %v528, 0.0
          %v1116 = vsel %vm996, %v530, 0.0
          %v1117 = vsel %vm997, %v533, 0.0
          %v1118 = vsel %vm998, %v535, 0.0
          %v1119 = vsel %vm999, %v538, 0.0
          %v1120 = vsel %vm1000, %v540, 0.0
          %v1121 = vsel %vm1001, %v543, 0.0
          %v1122 = vsel %vm1002, %v545, 0.0
          %v1123 = vadd.f32 %v1107, %v1108
          %v1124 = vadd.f32 %v1123, %v1109
          %v1125 = vadd.f32 %v1124, %v1110
          %v1126 = vadd.f32 %v1125, %v1111
          %v1127 = vadd.f32 %v1126, %v1112
          %v1128 = vadd.f32 %v1127, %v1113
          %v1129 = vadd.f32 %v1128, %v1114
          %v1130 = vadd.f32 %v1129, %v1115
          %v1131 = vadd.f32 %v1130, %v1116
          %v1132 = vadd.f32 %v1131, %v1117
          %v1133 = vadd.f32 %v1132, %v1118
          %v1134 = vadd.f32 %v1133, %v1119
          %v1135 = vadd.f32 %v1134, %v1120
          %v1136 = vadd.f32 %v1135, %v1121
          %v1137 = vadd.f32 %v1136, %v1122
          %v1138 = vrot.slane %v1137, 4
          %v1139 = vadd.f32 %v1137, %v1138
          %v1140 = vrot.slane %v1139, 2
          %v1141 = vadd.f32 %v1139, %v1140
          %v1142 = vrot.slane %v1141, 1
          %v1143 = vadd.f32 %v1141, %v1142
          %v1144 = vadd.f32 %v1106, %v1143
          %1145 = vst [vmem:[#allocation4] sm:$0x1] %v1144
        $region93: #{tpu_custom_call.1} parent=76 // pred_fallthru
          _
        %p1146 = scmp.eq.s32.totalorder %s24, 1
        // Predicated region
        $region94: #{tpu_custom_call.1} parent=76 // pred_check
          %p1147 = pneg %p1146
        $region95: #{tpu_custom_call.1} parent=76 // pred_check_branch
          %1149 = sbr.rel (%p1147) target = $region97
        $region96: #{tpu_custom_call.1} parent=76 // pred_region
          %v1150 = vld [vmem:[#allocation2] sm:$0x1]
          %v1151 = vld [vmem:[#allocation3] sm:$0x1]
          %v1152 = vlog2.pop %v1151
          %v1153 = vmul.f32 %v1152, 0.6931472
          %v1154 = vadd.f32 %v1150, %v1153
          %v1155 = vld [vmem:[#allocation4] sm:$0x1]
          %v1156 = vld [vmem:[%s376] sm:$0x1]
          %v1157 = vrcp.pop %v1156
          %v1158 = vmul.f32 %v1156, %v1157
          %v1159 = vsub.f32 1.0, %v1158
          %v1160 = vmul.f32 %v1157, %v1159
          %v1161 = vadd.f32 %v1157, %v1160
          %vm1162 = vweird.f32 %v1156
          %vm1163 = vweird.f32 %v1157
          %vm1164 = vmor %vm1162, %vm1163
          %v1165 = vsel %vm1164, %v1157, %v1161
          %v1166 = vand.u32 2147483647, %v1156
          %vm1167 = vcmp.eq.f32.partialorder %v1166, 8.507059e+37
          %v1168 = vand.u32 %v1156, 2147483648
          %v1169 = vor.u32 1.1754944e-38, %v1168
          %v1170 = vsel %vm1167, %v1169, %v1165
          %v1171 = vmul.f32 %v1155, %v1170
          %v1172 = vsub.f32 %v1171, %v1154
          %v1173 = vmul.f32 %v1172, -7.142857
          %1174 = vst [vmem:[%s358] sm:$0x1] %v1173
        $region97: #{tpu_custom_call.1} parent=76 // pred_fallthru
          _
        %s1175 = sand.u32 %s169, 1
        %s1176 = scalar_lea.sflag [#allocation7], %s1175
        %s1177 = sand.u32 %s169, 1
        %s1178 = scalar_lea.vmem [#allocation6], %s1177
        // Predicated region
        $region98: #{tpu_custom_call.1} parent=76 // pred_check
          %p1179 = pneg %p179
        $region99: #{tpu_custom_call.1} parent=76 // pred_check_branch
          %1181 = sbr.rel (%p1179) target = $region101
        $region100: #{tpu_custom_call.1} parent=76 // pred_region
          %1183 = vsyncadd %s1176, 0
          %s1184 = scalar_lea.hbm %s5, %s23
          %s1186 = sshll.u32 %s1178, 4
          %s1187 = int_to_ptr.vmem [resolvable:$true] %s1186
          %s1188 = sshll.u32 %s1184, 4
          %s1189 = int_to_ptr.hbm [resolvable:$true] %s1188
          %1191 = dma.vmem_to_hbm [thread:$0]  %s1187, 16, %s1189, %s1176
        $region101: #{tpu_custom_call.1} parent=76 // pred_fallthru
          _
      $region77: #{tpu_custom_call.1} parent=5 // pred_fallthru
        _
      %p1192 = scmp.le.s32.totalorder 2, %s14
      // Predicated region
      $region102: #{tpu_custom_call.1} parent=5 // pred_check
        %p1193 = pneg %p1192
      $region103: #{tpu_custom_call.1} parent=5 // pred_check_branch
        %1195 = sbr.rel (%p1193) target = $region105
      $region104: #{tpu_custom_call.1} parent=5 // pred_region
        %s1196 = ssub.s32 %s14, 2
        // Predicated region
        $region106: #{tpu_custom_call.1} parent=104 // pred_check
          %p1197 = pneg %p185
        $region107: #{tpu_custom_call.1} parent=104 // pred_check_branch
          %1199 = sbr.rel (%p1197) target = $region109
        $region108: #{tpu_custom_call.1} parent=104 // pred_region
          %s1200 = sand.u32 %s170, 1
          %s1201 = scalar_lea.sflag [#allocation7], %s1200
          %s1202 = sand.u32 %s170, 1
          %s1203 = scalar_lea.vmem [#allocation6], %s1202
          %1205 = dma.done %s1201, 16
        $region109: #{tpu_custom_call.1} parent=104 // pred_fallthru
          _
      $region105: #{tpu_custom_call.1} parent=5 // pred_fallthru
        _
    $region6: #{tpu_custom_call.1} parent=1 // loop_footer
      %s18 = sadd.s32 1, %s14
    $region7: #{tpu_custom_call.1} parent=1 // loop_footer_branch
      %13 = sbr.rel target = $region3
    $region8: #{tpu_custom_call.1} parent=1 // loop_exit
      _
    %1206 = vsyncpa [#allocation7], 1
    %s1207 = scalar_lea.sflag [#allocation7], 1
    %1208 = vsyncpa %s1207, 1

</llo_original>
